<compile_context>
chip_gen: v7x
topology: tpu7x:2x2x1
jax: 0.10.0
libtpu: 0.0.40
codegen_flags: <defaults>
</compile_context>

<pallas_src>
import functools

import jax
import jax.numpy as jnp
from jax.experimental import pallas as pl
from jax.experimental.pallas import tpu as pltpu


# ----------------------------- Pallas kernels --------------------------------

def _dice_sums_kernel(logit_ref, label_ref, inter_ref, psum_ref, tsum_ref, *,
                      valid_elems, tile_rows, need_mask):
    """Per-class softmax / one-hot partial sums for one batch element.

    logit_ref: (C, tile_rows, 128) float   label_ref: (tile_rows, 128) int
    outputs:   (C, 128) f32 accumulators (reduced over grid axis 1; lanes reduced
               in the wrapper).
    """
    j = pl.program_id(1)

    @pl.when(j == 0)
    def _init():
        inter_ref[...] = jnp.zeros_like(inter_ref)
        psum_ref[...] = jnp.zeros_like(psum_ref)
        tsum_ref[...] = jnp.zeros_like(tsum_ref)

    num_classes = logit_ref.shape[0]
    labels = label_ref[...].astype(jnp.int32)                    # (TR, 128)

    if need_mask:
        row = jax.lax.broadcasted_iota(jnp.int32, labels.shape, 0) + j * tile_rows
        lane = jax.lax.broadcasted_iota(jnp.int32, labels.shape, 1)
        valid = (row * 128 + lane) < valid_elems
        labels = jnp.where(valid, labels, -1)                    # never matches a class
    else:
        valid = None

    # Softmax over the (tiny) class axis, unrolled in Python: all work stays on
    # full (tile_rows, 128) slabs (VPU/EUP), no axis-0 reductions per vreg.
    xs = []
    for c in range(num_classes):
        xc = logit_ref[c].astype(jnp.float32)                    # (TR, 128)
        if need_mask:
            xc = jnp.where(valid, xc, 0.0)                       # keep exp() finite on garbage
        xs.append(xc)

    m = xs[0]
    for c in range(1, num_classes):
        m = jnp.maximum(m, xs[c])
    es = [jnp.exp(xc - m) for xc in xs]
    denom = es[0]
    for c in range(1, num_classes):
        denom = denom + es[c]
    inv = 1.0 / denom                                            # exact division (matches reference)
    if need_mask:
        inv = jnp.where(valid, inv, 0.0)                         # padded columns contribute nothing

    inter_rows, psum_rows, tsum_rows = [], [], []
    for c in range(num_classes):
        p_c = es[c] * inv                                        # softmax prob of class c
        t_c = (labels == c).astype(jnp.float32)                  # one-hot target
        inter_rows.append(jnp.sum(p_c * t_c, axis=0, keepdims=True))
        psum_rows.append(jnp.sum(p_c, axis=0, keepdims=True))
        tsum_rows.append(jnp.sum(t_c, axis=0, keepdims=True))

    inter_ref[...] += jnp.concatenate(inter_rows, axis=0)
    psum_ref[...] += jnp.concatenate(psum_rows, axis=0)
    tsum_ref[...] += jnp.concatenate(tsum_rows, axis=0)


def _bce_sums_kernel(logit_ref, mask_ref, pos_ref, neg_ref, bpos_ref, bneg_ref, *,
                     valid_rows, tile_rows, need_mask):
    """pos/neg counts and BCE-with-logits sums over pos / neg elements.

    logit_ref: (tile_rows, 128) float   mask_ref: (tile_rows, 128) int (0/1, >1 = ignore)
    outputs:   (1, 128) f32 lane accumulators.
    """
    j = pl.program_id(1)

    @pl.when(j == 0)
    def _init():
        pos_ref[...] = jnp.zeros_like(pos_ref)
        neg_ref[...] = jnp.zeros_like(neg_ref)
        bpos_ref[...] = jnp.zeros_like(bpos_ref)
        bneg_ref[...] = jnp.zeros_like(bneg_ref)

    x = logit_ref[...].astype(jnp.float32)
    t = mask_ref[...].astype(jnp.int32)                          # raw integer edge labels

    if need_mask:
        row = jax.lax.broadcasted_iota(jnp.int32, t.shape, 0) + j * tile_rows
        valid = row < valid_rows
        x = jnp.where(valid, x, 0.0)
        t = jnp.where(valid, t, 2)                               # out-of-range rows -> ignore

    posf = (t == 1).astype(jnp.float32)
    negf = (t == 0).astype(jnp.float32)
    # Numerically-stable BCE-with-logits.  The target only matters where posf/negf select
    # it, so posf doubles as the float target.  (log(1+z) with z=exp(-|x|) in (0,1] matches
    # log1p to within f32 rounding of the full BCE term.)
    bce = jnp.maximum(x, 0.0) - x * posf + jnp.log(1.0 + jnp.exp(-jnp.abs(x)))

    pos_ref[...] += jnp.sum(posf, axis=0, keepdims=True)
    neg_ref[...] += jnp.sum(negf, axis=0, keepdims=True)
    bpos_ref[...] += jnp.sum(bce * posf, axis=0, keepdims=True)
    bneg_ref[...] += jnp.sum(bce * negf, axis=0, keepdims=True)


# ----------------------------- pallas_call wrappers ---------------------------

def dice_class_sums(logits_ncrl, labels_nrl, *, valid_elems, max_tile_rows=512):
    """logits (N, C, R, 128) f32, labels (N, R, 128) int8/int32 -> three (N, C, 128) sums."""
    N, C, R, L = logits_ncrl.shape
    assert L == 128 and max_tile_rows % 32 == 0
    tile_rows = R if R <= max_tile_rows else max_tile_rows
    grid = (N, pl.cdiv(R, tile_rows))
    need_mask = (valid_elems % 128 != 0) or (R % tile_rows != 0)
    kernel = functools.partial(_dice_sums_kernel, valid_elems=valid_elems,
                               tile_rows=tile_rows, need_mask=need_mask)
    out_shape = tuple(jax.ShapeDtypeStruct((N, C, 128), jnp.float32) for _ in range(3))
    return pl.pallas_call(
        kernel,
        out_shape=out_shape,
        grid_spec=pltpu.PrefetchScalarGridSpec(
            num_scalar_prefetch=0,
            grid=grid,
            in_specs=[
                pl.BlockSpec((None, C, tile_rows, 128), lambda n, j: (n, 0, j, 0)),
                pl.BlockSpec((None, tile_rows, 128), lambda n, j: (n, j, 0)),
            ],
            out_specs=[pl.BlockSpec((None, C, 128), lambda n, j: (n, 0, 0))
                       for _ in range(3)],
        ),
        compiler_params=pltpu.CompilerParams(
            dimension_semantics=("parallel", "arbitrary"),
            vmem_limit_bytes=32 * 1024 * 1024),
    )(logits_ncrl, labels_nrl)


def bce_balanced_sums(logits_prl, mask_prl, *, max_tile_rows=2048):
    """logits/mask (P, R, 128) -> four (P, 1, 128) sums (pos, neg, bce_pos, bce_neg)."""
    P, R, L = logits_prl.shape
    assert L == 128 and max_tile_rows % 32 == 0
    tile_rows = R if R <= max_tile_rows else max_tile_rows
    grid = (P, pl.cdiv(R, tile_rows))
    need_mask = (R % tile_rows != 0)
    kernel = functools.partial(_bce_sums_kernel, valid_rows=R,
                               tile_rows=tile_rows, need_mask=need_mask)
    out_shape = tuple(jax.ShapeDtypeStruct((P, 1, 128), jnp.float32) for _ in range(4))
    return pl.pallas_call(
        kernel,
        out_shape=out_shape,
        grid_spec=pltpu.PrefetchScalarGridSpec(
            num_scalar_prefetch=0,
            grid=grid,
            in_specs=[
                pl.BlockSpec((None, tile_rows, 128), lambda p, j: (p, j, 0)),
                pl.BlockSpec((None, tile_rows, 128), lambda p, j: (p, j, 0)),
            ],
            out_specs=[pl.BlockSpec((None, 1, 128), lambda p, j: (p, 0, 0))
                       for _ in range(4)],
        ),
        compiler_params=pltpu.CompilerParams(
            dimension_semantics=("parallel", "arbitrary"),
            vmem_limit_bytes=32 * 1024 * 1024),
    )(logits_prl, mask_prl)


# ----------------------------- module forward --------------------------------

@functools.partial(jax.jit, static_argnames=("num_classes", "edge_weight", "dice_weight",
                                             "dice_tile_rows", "bce_tile_rows"))
def joint_edge_dice_loss(segin, edgein, segmask, edgemask, *, num_classes,
                         edge_weight=1.0, dice_weight=1.0, eps=1e-5,
                         dice_tile_rows=512, bce_tile_rows=2048):
    """Forward pass of JointEdgeDiceLoss (defaults: dice region loss + binary edge BCE)."""
    N, C, D, H, W = segin.shape
    assert C == num_classes
    M = D * H * W

    # ---- region loss: SoftDiceLoss ----
    # TODO(synk): SoftDiceLoss is not defined in the reference file; the canonical softmax
    # multi-class soft dice (per-class sums over batch + volume) is used.
    pad = (-M) % 128
    seg_l = segin.reshape(N, C, M)              # free reshape; no NCDHW->C... HBM transpose
    seg_t = segmask.reshape(N, M)               # int8 labels streamed as-is
    if pad:  # TODO(synk): pad path for volumes not divisible by 128 (not hit in the demo)
        seg_l = jnp.pad(seg_l, ((0, 0), (0, 0), (0, pad)))
        seg_t = jnp.pad(seg_t, ((0, 0), (0, pad)), constant_values=num_classes)
    R = (M + pad) // 128
    inter_o, psum_o, tsum_o = dice_class_sums(
        seg_l.reshape(N, C, R, 128), seg_t.reshape(N, R, 128),
        valid_elems=M, max_tile_rows=dice_tile_rows)
    inter = jnp.sum(inter_o, axis=(0, 2))
    psum = jnp.sum(psum_o, axis=(0, 2))
    tsum = jnp.sum(tsum_o, axis=(0, 2))
    dice = (2.0 * inter + eps) / (psum + tsum + eps)
    region_loss = dice_weight * (1.0 - jnp.mean(dice))

    # ---- edge loss: bce3d with edge_type='binary_*', reduction='mean' ----
    if not isinstance(edgein, (list, tuple)):
        edgein = [edgein]
    edge_loss = jnp.float32(0.0)
    for single_edge in edgein:
        numel = single_edge.size
        epad = (-numel) % 128
        x_flat = single_edge.reshape(-1)
        t_flat = edgemask.reshape(-1)
        if epad:
            x_flat = jnp.pad(x_flat, (0, epad))
            t_flat = jnp.pad(t_flat, (0, epad), constant_values=2)   # ignore -> zero weight
        rows = (numel + epad) // 128
        nsplit = 2 if (rows % 2 == 0 and rows >= 16) else 1          # v7x: one chunk per TC
        pos_o, neg_o, bpos_o, bneg_o = bce_balanced_sums(
            x_flat.reshape(nsplit, rows // nsplit, 128),
            t_flat.reshape(nsplit, rows // nsplit, 128),
            max_tile_rows=bce_tile_rows)
        pos_cnt = jnp.sum(pos_o)
        neg_cnt = jnp.sum(neg_o)
        bce_pos = jnp.sum(bpos_o)
        bce_neg = jnp.sum(bneg_o)
        sum_num = pos_cnt + neg_cnt
        # mean(weight * bce) over all numel elements; ignore (>1) has weight 0
        edge_bce = (neg_cnt / sum_num * bce_pos + pos_cnt / sum_num * bce_neg) / numel
        edge_loss = edge_loss + edge_weight * edge_bce

    return {"region_loss": region_loss, "edge_loss": edge_loss}


# ----------------------------- pure-JAX reference -----------------------------

def _reference(segin, edgein, segmask, edgemask, num_classes, eps=1e-5):
    C = num_classes
    p = jax.nn.softmax(segin, axis=1)
    onehot = jax.nn.one_hot(segmask[:, 0].astype(jnp.int32), C, axis=1, dtype=jnp.float32)
    inter = jnp.sum(p * onehot, axis=(0, 2, 3, 4))
    psum = jnp.sum(p, axis=(0, 2, 3, 4))
    tsum = jnp.sum(onehot, axis=(0, 2, 3, 4))
    dice = (2.0 * inter + eps) / (psum + tsum + eps)
    region_loss = 1.0 - jnp.mean(dice)

    x = edgein.reshape(-1)
    t = edgemask.reshape(-1).astype(jnp.float32)
    pos = (t == 1.0)
    neg = (t == 0.0)
    pos_num = jnp.sum(pos.astype(jnp.float32))
    neg_num = jnp.sum(neg.astype(jnp.float32))
    sum_num = pos_num + neg_num
    w = jnp.where(pos, neg_num / sum_num, jnp.where(neg, pos_num / sum_num, 0.0))
    bce = jnp.maximum(x, 0.0) - x * t + jnp.log1p(jnp.exp(-jnp.abs(x)))
    edge_loss = jnp.mean(w * bce)
    return {"region_loss": region_loss, "edge_loss": edge_loss}


# ----------------------------- main -------------------------------------------

if __name__ == "__main__":
    def make_inputs(key, N, C, D, H, W):
        k1, k2, k3, k4 = jax.random.split(key, 4)
        segin = jax.random.normal(k1, (N, C, D, H, W), dtype=jnp.float32)
        # labels / edge mask as int8: small integer streams, compared in-kernel
        segmask = jax.random.randint(k2, (N, 1, D, H, W), 0, C, dtype=jnp.int32).astype(jnp.int8)
        edgein = jax.random.normal(k3, (N, 1, D, H, W), dtype=jnp.float32)
        # edge mask values: 0 (neg), 1 (pos), 2 (ignore, weight 0)
        edgemask = jax.random.randint(k4, (N, 1, D, H, W), 0, 3, dtype=jnp.int32).astype(jnp.int8)
        return segin, edgein, segmask, edgemask

    key = jax.random.PRNGKey(0)
    k_a, k_b = jax.random.split(key)

    # Config 1: small shapes, default (MiB-scale) tiles -> single block per batch element.
    N, C, D, H, W = 2, 4, 4, 16, 16
    segin, edgein, segmask, edgemask = make_inputs(k_a, N, C, D, H, W)
    losses = jax.block_until_ready(
        joint_edge_dice_loss(segin, edgein, segmask, edgemask, num_classes=C))
    ref = _reference(segin, edgein, segmask, edgemask, C)
    assert jnp.allclose(losses["region_loss"], ref["region_loss"], rtol=1e-4, atol=1e-5)
    assert jnp.allclose(losses["edge_loss"], ref["edge_loss"], rtol=1e-4, atol=1e-5)

    # Config 2: forces multi-step accumulation + tail masking (R % tile_rows != 0).
    N, C, D, H, W = 2, 4, 8, 40, 16
    segin, edgein, segmask, edgemask = make_inputs(k_b, N, C, D, H, W)
    losses = jax.block_until_ready(
        joint_edge_dice_loss(segin, edgein, segmask, edgemask, num_classes=C,
                             dice_tile_rows=32, bce_tile_rows=32))
    ref = _reference(segin, edgein, segmask, edgemask, C)
    assert jnp.allclose(losses["region_loss"], ref["region_loss"], rtol=1e-4, atol=1e-5)
    assert jnp.allclose(losses["edge_loss"], ref["edge_loss"], rtol=1e-4, atol=1e-5)

    print("KERNEL_OK")
</pallas_src>

<mosaic_0001>
module attributes {stable_mosaic.version = 11 : i64} {
  func.func @_bce_sums_kernel(%arg0: i32, %arg1: i32, %arg2: memref<1x8x128xf32, #tpu.memory_space<vmem>>, %arg3: memref<1x8x128xi8, #tpu.memory_space<vmem>>, %arg4: memref<1x1x128xf32, #tpu.memory_space<vmem>>, %arg5: memref<1x1x128xf32, #tpu.memory_space<vmem>>, %arg6: memref<1x1x128xf32, #tpu.memory_space<vmem>>, %arg7: memref<1x1x128xf32, #tpu.memory_space<vmem>>) attributes {dimension_semantics = [#tpu.dimension_semantics<parallel>, #tpu.dimension_semantics<arbitrary>], iteration_bounds = array<i64: 2, 1>, scalar_prefetch = 0 : i64, scratch_operands = 0 : i64, tpu.core_type = #tpu.core_type<tc>, window_params = [{transform_indices = @transform_0, window_bounds = array<i64: 1, 8, 128>}, {transform_indices = @transform_1, window_bounds = array<i64: 1, 8, 128>}, {transform_indices = @transform_2, window_bounds = array<i64: 1, 1, 128>}, {transform_indices = @transform_3, window_bounds = array<i64: 1, 1, 128>}, {transform_indices = @transform_4, window_bounds = array<i64: 1, 1, 128>}, {transform_indices = @transform_5, window_bounds = array<i64: 1, 1, 128>}]} {
    %c0_i32 = arith.constant 0 : i32
    %0 = arith.cmpi eq, %arg1, %c0_i32 : i32
    %1 = arith.extui %0 : i1 to i32
    %c0_i32_0 = arith.constant 0 : i32
    %2 = arith.cmpi ne, %1, %c0_i32_0 : i32
    scf.if %2 {
      %cst_37 = arith.constant 0.000000e+00 : f32
      %62 = vector.broadcast %cst_37 : f32 to vector<1x128xf32>
      %c0_38 = arith.constant 0 : index
      %c0_39 = arith.constant 0 : index
      %c0_40 = arith.constant 0 : index
      %63 = vector.load %arg4[%c0_38, %c0_39, %c0_40] : memref<1x1x128xf32, #tpu.memory_space<vmem>>, vector<1x1x128xf32>
      %64 = vector.shape_cast %63 : vector<1x1x128xf32> to vector<1x128xf32>
      %65 = vector.shape_cast %62 : vector<1x128xf32> to vector<1x1x128xf32>
      tpu.vector_store %arg4[%c0_38, %c0_39, %c0_40], %65 {strides = array<i32>} : memref<1x1x128xf32, #tpu.memory_space<vmem>>, vector<1x1x128xf32>,
      %cst_41 = arith.constant 0.000000e+00 : f32
      %66 = vector.broadcast %cst_41 : f32 to vector<1x128xf32>
      %c0_42 = arith.constant 0 : index
      %c0_43 = arith.constant 0 : index
      %c0_44 = arith.constant 0 : index
      %67 = vector.load %arg5[%c0_42, %c0_43, %c0_44] : memref<1x1x128xf32, #tpu.memory_space<vmem>>, vector<1x1x128xf32>
      %68 = vector.shape_cast %67 : vector<1x1x128xf32> to vector<1x128xf32>
      %69 = vector.shape_cast %66 : vector<1x128xf32> to vector<1x1x128xf32>
      tpu.vector_store %arg5[%c0_42, %c0_43, %c0_44], %69 {strides = array<i32>} : memref<1x1x128xf32, #tpu.memory_space<vmem>>, vector<1x1x128xf32>,
      %cst_45 = arith.constant 0.000000e+00 : f32
      %70 = vector.broadcast %cst_45 : f32 to vector<1x128xf32>
      %c0_46 = arith.constant 0 : index
      %c0_47 = arith.constant 0 : index
      %c0_48 = arith.constant 0 : index
      %71 = vector.load %arg6[%c0_46, %c0_47, %c0_48] : memref<1x1x128xf32, #tpu.memory_space<vmem>>, vector<1x1x128xf32>
      %72 = vector.shape_cast %71 : vector<1x1x128xf32> to vector<1x128xf32>
      %73 = vector.shape_cast %70 : vector<1x128xf32> to vector<1x1x128xf32>
      tpu.vector_store %arg6[%c0_46, %c0_47, %c0_48], %73 {strides = array<i32>} : memref<1x1x128xf32, #tpu.memory_space<vmem>>, vector<1x1x128xf32>,
      %cst_49 = arith.constant 0.000000e+00 : f32
      %74 = vector.broadcast %cst_49 : f32 to vector<1x128xf32>
      %c0_50 = arith.constant 0 : index
      %c0_51 = arith.constant 0 : index
      %c0_52 = arith.constant 0 : index
      %75 = vector.load %arg7[%c0_50, %c0_51, %c0_52] : memref<1x1x128xf32, #tpu.memory_space<vmem>>, vector<1x1x128xf32>
      %76 = vector.shape_cast %75 : vector<1x1x128xf32> to vector<1x128xf32>
      %77 = vector.shape_cast %74 : vector<1x128xf32> to vector<1x1x128xf32>
      tpu.vector_store %arg7[%c0_50, %c0_51, %c0_52], %77 {strides = array<i32>} : memref<1x1x128xf32, #tpu.memory_space<vmem>>, vector<1x1x128xf32>,
    } else {
    }
    %c0 = arith.constant 0 : index
    %c0_1 = arith.constant 0 : index
    %c0_2 = arith.constant 0 : index
    %3 = vector.load %arg2[%c0, %c0_1, %c0_2] : memref<1x8x128xf32, #tpu.memory_space<vmem>>, vector<1x8x128xf32>
    %4 = vector.shape_cast %3 : vector<1x8x128xf32> to vector<8x128xf32>
    %c0_3 = arith.constant 0 : index
    %c0_4 = arith.constant 0 : index
    %c0_5 = arith.constant 0 : index
    %5 = vector.load %arg3[%c0_3, %c0_4, %c0_5] : memref<1x8x128xi8, #tpu.memory_space<vmem>>, vector<1x8x128xi8>
    %6 = vector.shape_cast %5 : vector<1x8x128xi8> to vector<8x128xi8>
    %7 = arith.extsi %6 : vector<8x128xi8> to vector<8x128xi32>
    %c1_i32 = arith.constant 1 : i32
    %8 = vector.broadcast %c1_i32 : i32 to vector<8x128xi32>
    %9 = arith.cmpi eq, %7, %8 : vector<8x128xi32>
    %10 = arith.extui %9 : vector<8x128xi1> to vector<8x128xi32>
    %11 = arith.sitofp %10 : vector<8x128xi32> to vector<8x128xf32>
    %c0_i32_6 = arith.constant 0 : i32
    %12 = vector.broadcast %c0_i32_6 : i32 to vector<8x128xi32>
    %13 = arith.cmpi eq, %7, %12 : vector<8x128xi32>
    %14 = arith.extui %13 : vector<8x128xi1> to vector<8x128xi32>
    %15 = arith.sitofp %14 : vector<8x128xi32> to vector<8x128xf32>
    %cst = arith.constant 0.000000e+00 : f32
    %16 = vector.broadcast %cst : f32 to vector<8x128xf32>
    %17 = arith.maximumf %4, %16 : vector<8x128xf32>
    %18 = arith.mulf %4, %11 : vector<8x128xf32>
    %19 = arith.subf %17, %18 : vector<8x128xf32>
    %20 = math.absf %4 : vector<8x128xf32>
    %cst_7 = arith.constant 0.000000e+00 : f32
    %21 = vector.broadcast %cst_7 : f32 to vector<8x128xf32>
    %22 = arith.subf %21, %20 : vector<8x128xf32>
    %23 = math.exp %22 : vector<8x128xf32>
    %cst_8 = arith.constant 1.000000e+00 : f32
    %24 = vector.broadcast %cst_8 : f32 to vector<8x128xf32>
    %25 = arith.addf %24, %23 : vector<8x128xf32>
    %26 = math.log %25 : vector<8x128xf32>
    %27 = arith.addf %19, %26 : vector<8x128xf32>
    %c0_9 = arith.constant 0 : index
    %c0_10 = arith.constant 0 : index
    %c0_11 = arith.constant 0 : index
    %28 = vector.load %arg4[%c0_9, %c0_10, %c0_11] : memref<1x1x128xf32, #tpu.memory_space<vmem>>, vector<1x1x128xf32>
    %29 = vector.shape_cast %28 : vector<1x1x128xf32> to vector<1x128xf32>
    %cst_12 = arith.constant dense<0.000000e+00> : vector<128xf32>
    %30 = vector.multi_reduction <add>, %11, %cst_12 [0] : vector<8x128xf32> to vector<128xf32>
    %31 = vector.shape_cast %30 : vector<128xf32> to vector<1x128xf32>
    %32 = arith.addf %29, %31 : vector<1x128xf32>
    %c0_13 = arith.constant 0 : index
    %c0_14 = arith.constant 0 : index
    %c0_15 = arith.constant 0 : index
    %33 = vector.load %arg4[%c0_13, %c0_14, %c0_15] : memref<1x1x128xf32, #tpu.memory_space<vmem>>, vector<1x1x128xf32>
    %34 = vector.shape_cast %33 : vector<1x1x128xf32> to vector<1x128xf32>
    %35 = vector.shape_cast %32 : vector<1x128xf32> to vector<1x1x128xf32>
    tpu.vector_store %arg4[%c0_13, %c0_14, %c0_15], %35 {strides = array<i32>} : memref<1x1x128xf32, #tpu.memory_space<vmem>>, vector<1x1x128xf32>,
    %c0_16 = arith.constant 0 : index
    %c0_17 = arith.constant 0 : index
    %c0_18 = arith.constant 0 : index
    %36 = vector.load %arg5[%c0_16, %c0_17, %c0_18] : memref<1x1x128xf32, #tpu.memory_space<vmem>>, vector<1x1x128xf32>
    %37 = vector.shape_cast %36 : vector<1x1x128xf32> to vector<1x128xf32>
    %cst_19 = arith.constant dense<0.000000e+00> : vector<128xf32>
    %38 = vector.multi_reduction <add>, %15, %cst_19 [0] : vector<8x128xf32> to vector<128xf32>
    %39 = vector.shape_cast %38 : vector<128xf32> to vector<1x128xf32>
    %40 = arith.addf %37, %39 : vector<1x128xf32>
    %c0_20 = arith.constant 0 : index
    %c0_21 = arith.constant 0 : index
    %c0_22 = arith.constant 0 : index
    %41 = vector.load %arg5[%c0_20, %c0_21, %c0_22] : memref<1x1x128xf32, #tpu.memory_space<vmem>>, vector<1x1x128xf32>
    %42 = vector.shape_cast %41 : vector<1x1x128xf32> to vector<1x128xf32>
    %43 = vector.shape_cast %40 : vector<1x128xf32> to vector<1x1x128xf32>
    tpu.vector_store %arg5[%c0_20, %c0_21, %c0_22], %43 {strides = array<i32>} : memref<1x1x128xf32, #tpu.memory_space<vmem>>, vector<1x1x128xf32>,
    %c0_23 = arith.constant 0 : index
    %c0_24 = arith.constant 0 : index
    %c0_25 = arith.constant 0 : index
    %44 = vector.load %arg6[%c0_23, %c0_24, %c0_25] : memref<1x1x128xf32, #tpu.memory_space<vmem>>, vector<1x1x128xf32>
    %45 = vector.shape_cast %44 : vector<1x1x128xf32> to vector<1x128xf32>
    %46 = arith.mulf %27, %11 : vector<8x128xf32>
    %cst_26 = arith.constant dense<0.000000e+00> : vector<128xf32>
    %47 = vector.multi_reduction <add>, %46, %cst_26 [0] : vector<8x128xf32> to vector<128xf32>
    %48 = vector.shape_cast %47 : vector<128xf32> to vector<1x128xf32>
    %49 = arith.addf %45, %48 : vector<1x128xf32>
    %c0_27 = arith.constant 0 : index
    %c0_28 = arith.constant 0 : index
    %c0_29 = arith.constant 0 : index
    %50 = vector.load %arg6[%c0_27, %c0_28, %c0_29] : memref<1x1x128xf32, #tpu.memory_space<vmem>>, vector<1x1x128xf32>
    %51 = vector.shape_cast %50 : vector<1x1x128xf32> to vector<1x128xf32>
    %52 = vector.shape_cast %49 : vector<1x128xf32> to vector<1x1x128xf32>
    tpu.vector_store %arg6[%c0_27, %c0_28, %c0_29], %52 {strides = array<i32>} : memref<1x1x128xf32, #tpu.memory_space<vmem>>, vector<1x1x128xf32>,
    %c0_30 = arith.constant 0 : index
    %c0_31 = arith.constant 0 : index
    %c0_32 = arith.constant 0 : index
    %53 = vector.load %arg7[%c0_30, %c0_31, %c0_32] : memref<1x1x128xf32, #tpu.memory_space<vmem>>, vector<1x1x128xf32>
    %54 = vector.shape_cast %53 : vector<1x1x128xf32> to vector<1x128xf32>
    %55 = arith.mulf %27, %15 : vector<8x128xf32>
    %cst_33 = arith.constant dense<0.000000e+00> : vector<128xf32>
    %56 = vector.multi_reduction <add>, %55, %cst_33 [0] : vector<8x128xf32> to vector<128xf32>
    %57 = vector.shape_cast %56 : vector<128xf32> to vector<1x128xf32>
    %58 = arith.addf %54, %57 : vector<1x128xf32>
    %c0_34 = arith.constant 0 : index
    %c0_35 = arith.constant 0 : index
    %c0_36 = arith.constant 0 : index
    %59 = vector.load %arg7[%c0_34, %c0_35, %c0_36] : memref<1x1x128xf32, #tpu.memory_space<vmem>>, vector<1x1x128xf32>
    %60 = vector.shape_cast %59 : vector<1x1x128xf32> to vector<1x128xf32>
    %61 = vector.shape_cast %58 : vector<1x128xf32> to vector<1x1x128xf32>
    tpu.vector_store %arg7[%c0_34, %c0_35, %c0_36], %61 {strides = array<i32>} : memref<1x1x128xf32, #tpu.memory_space<vmem>>, vector<1x1x128xf32>,
    return
  }
  func.func @transform_0(%arg0: i32, %arg1: i32) -> (i32, i32, i32) {
    %c0_i32 = arith.constant 0 : i32
    %c0_i32_0 = arith.constant 0 : i32
    return %arg0, %arg1, %c0_i32 : i32, i32, i32
  }
  func.func @transform_1(%arg0: i32, %arg1: i32) -> (i32, i32, i32) {
    %c0_i32 = arith.constant 0 : i32
    %c0_i32_0 = arith.constant 0 : i32
    return %arg0, %arg1, %c0_i32 : i32, i32, i32
  }
  func.func @transform_2(%arg0: i32, %arg1: i32) -> (i32, i32, i32) {
    %c0_i32 = arith.constant 0 : i32
    %c0_i32_0 = arith.constant 0 : i32
    %c0_i32_1 = arith.constant 0 : i32
    return %arg0, %c0_i32, %c0_i32_0 : i32, i32, i32
  }
  func.func @transform_3(%arg0: i32, %arg1: i32) -> (i32, i32, i32) {
    %c0_i32 = arith.constant 0 : i32
    %c0_i32_0 = arith.constant 0 : i32
    %c0_i32_1 = arith.constant 0 : i32
    return %arg0, %c0_i32, %c0_i32_0 : i32, i32, i32
  }
  func.func @transform_4(%arg0: i32, %arg1: i32) -> (i32, i32, i32) {
    %c0_i32 = arith.constant 0 : i32
    %c0_i32_0 = arith.constant 0 : i32
    %c0_i32_1 = arith.constant 0 : i32
    return %arg0, %c0_i32, %c0_i32_0 : i32, i32, i32
  }
  func.func @transform_5(%arg0: i32, %arg1: i32) -> (i32, i32, i32) {
    %c0_i32 = arith.constant 0 : i32
    %c0_i32_0 = arith.constant 0 : i32
    %c0_i32_1 = arith.constant 0 : i32
    return %arg0, %c0_i32, %c0_i32_0 : i32, i32, i32
  }
}

module attributes {stable_mosaic.version = 11 : i64} {
  func.func @_dice_sums_kernel(%arg0: i32, %arg1: i32, %arg2: memref<1x4x8x128xf32, #tpu.memory_space<vmem>>, %arg3: memref<1x8x128xi8, #tpu.memory_space<vmem>>, %arg4: memref<1x4x128xf32, #tpu.memory_space<vmem>>, %arg5: memref<1x4x128xf32, #tpu.memory_space<vmem>>, %arg6: memref<1x4x128xf32, #tpu.memory_space<vmem>>) attributes {dimension_semantics = [#tpu.dimension_semantics<parallel>, #tpu.dimension_semantics<arbitrary>], iteration_bounds = array<i64: 2, 1>, scalar_prefetch = 0 : i64, scratch_operands = 0 : i64, tpu.core_type = #tpu.core_type<tc>, window_params = [{transform_indices = @transform_0, window_bounds = array<i64: 1, 4, 8, 128>}, {transform_indices = @transform_1, window_bounds = array<i64: 1, 8, 128>}, {transform_indices = @transform_2, window_bounds = array<i64: 1, 4, 128>}, {transform_indices = @transform_3, window_bounds = array<i64: 1, 4, 128>}, {transform_indices = @transform_4, window_bounds = array<i64: 1, 4, 128>}]} {
    %c0_i32 = arith.constant 0 : i32
    %0 = arith.cmpi eq, %arg1, %c0_i32 : i32
    %1 = arith.extui %0 : i1 to i32
    %c0_i32_0 = arith.constant 0 : i32
    %2 = arith.cmpi ne, %1, %c0_i32_0 : i32
    scf.if %2 {
      %cst_47 = arith.constant 0.000000e+00 : f32
      %99 = vector.broadcast %cst_47 : f32 to vector<4x128xf32>
      %c0_48 = arith.constant 0 : index
      %c0_49 = arith.constant 0 : index
      %c0_50 = arith.constant 0 : index
      %100 = vector.load %arg4[%c0_48, %c0_49, %c0_50] : memref<1x4x128xf32, #tpu.memory_space<vmem>>, vector<1x4x128xf32>
      %101 = vector.shape_cast %100 : vector<1x4x128xf32> to vector<4x128xf32>
      %102 = vector.shape_cast %99 : vector<4x128xf32> to vector<1x4x128xf32>
      tpu.vector_store %arg4[%c0_48, %c0_49, %c0_50], %102 {strides = array<i32>} : memref<1x4x128xf32, #tpu.memory_space<vmem>>, vector<1x4x128xf32>,
      %cst_51 = arith.constant 0.000000e+00 : f32
      %103 = vector.broadcast %cst_51 : f32 to vector<4x128xf32>
      %c0_52 = arith.constant 0 : index
      %c0_53 = arith.constant 0 : index
      %c0_54 = arith.constant 0 : index
      %104 = vector.load %arg5[%c0_52, %c0_53, %c0_54] : memref<1x4x128xf32, #tpu.memory_space<vmem>>, vector<1x4x128xf32>
      %105 = vector.shape_cast %104 : vector<1x4x128xf32> to vector<4x128xf32>
      %106 = vector.shape_cast %103 : vector<4x128xf32> to vector<1x4x128xf32>
      tpu.vector_store %arg5[%c0_52, %c0_53, %c0_54], %106 {strides = array<i32>} : memref<1x4x128xf32, #tpu.memory_space<vmem>>, vector<1x4x128xf32>,
      %cst_55 = arith.constant 0.000000e+00 : f32
      %107 = vector.broadcast %cst_55 : f32 to vector<4x128xf32>
      %c0_56 = arith.constant 0 : index
      %c0_57 = arith.constant 0 : index
      %c0_58 = arith.constant 0 : index
      %108 = vector.load %arg6[%c0_56, %c0_57, %c0_58] : memref<1x4x128xf32, #tpu.memory_space<vmem>>, vector<1x4x128xf32>
      %109 = vector.shape_cast %108 : vector<1x4x128xf32> to vector<4x128xf32>
      %110 = vector.shape_cast %107 : vector<4x128xf32> to vector<1x4x128xf32>
      tpu.vector_store %arg6[%c0_56, %c0_57, %c0_58], %110 {strides = array<i32>} : memref<1x4x128xf32, #tpu.memory_space<vmem>>, vector<1x4x128xf32>,
    } else {
    }
    %c0 = arith.constant 0 : index
    %c0_1 = arith.constant 0 : index
    %c0_2 = arith.constant 0 : index
    %3 = vector.load %arg3[%c0, %c0_1, %c0_2] : memref<1x8x128xi8, #tpu.memory_space<vmem>>, vector<1x8x128xi8>
    %4 = vector.shape_cast %3 : vector<1x8x128xi8> to vector<8x128xi8>
    %5 = arith.extsi %4 : vector<8x128xi8> to vector<8x128xi32>
    %c0_3 = arith.constant 0 : index
    %c0_4 = arith.constant 0 : index
    %c0_5 = arith.constant 0 : index
    %c0_6 = arith.constant 0 : index
    %6 = vector.load %arg2[%c0_3, %c0_4, %c0_5, %c0_6] : memref<1x4x8x128xf32, #tpu.memory_space<vmem>>, vector<1x1x8x128xf32>
    %7 = vector.shape_cast %6 : vector<1x1x8x128xf32> to vector<8x128xf32>
    %c0_7 = arith.constant 0 : index
    %c1 = arith.constant 1 : index
    %c0_8 = arith.constant 0 : index
    %c0_9 = arith.constant 0 : index
    %8 = vector.load %arg2[%c0_7, %c1, %c0_8, %c0_9] : memref<1x4x8x128xf32, #tpu.memory_space<vmem>>, vector<1x1x8x128xf32>
    %9 = vector.shape_cast %8 : vector<1x1x8x128xf32> to vector<8x128xf32>
    %c0_10 = arith.constant 0 : index
    %c2 = arith.constant 2 : index
    %c0_11 = arith.constant 0 : index
    %c0_12 = arith.constant 0 : index
    %10 = vector.load %arg2[%c0_10, %c2, %c0_11, %c0_12] : memref<1x4x8x128xf32, #tpu.memory_space<vmem>>, vector<1x1x8x128xf32>
    %11 = vector.shape_cast %10 : vector<1x1x8x128xf32> to vector<8x128xf32>
    %c0_13 = arith.constant 0 : index
    %c3 = arith.constant 3 : index
    %c0_14 = arith.constant 0 : index
    %c0_15 = arith.constant 0 : index
    %12 = vector.load %arg2[%c0_13, %c3, %c0_14, %c0_15] : memref<1x4x8x128xf32, #tpu.memory_space<vmem>>, vector<1x1x8x128xf32>
    %13 = vector.shape_cast %12 : vector<1x1x8x128xf32> to vector<8x128xf32>
    %14 = arith.maximumf %7, %9 : vector<8x128xf32>
    %15 = arith.maximumf %14, %11 : vector<8x128xf32>
    %16 = arith.maximumf %15, %13 : vector<8x128xf32>
    %17 = arith.subf %7, %16 : vector<8x128xf32>
    %18 = math.exp %17 : vector<8x128xf32>
    %19 = arith.subf %9, %16 : vector<8x128xf32>
    %20 = math.exp %19 : vector<8x128xf32>
    %21 = arith.subf %11, %16 : vector<8x128xf32>
    %22 = math.exp %21 : vector<8x128xf32>
    %23 = arith.subf %13, %16 : vector<8x128xf32>
    %24 = math.exp %23 : vector<8x128xf32>
    %25 = arith.addf %18, %20 : vector<8x128xf32>
    %26 = arith.addf %25, %22 : vector<8x128xf32>
    %27 = arith.addf %26, %24 : vector<8x128xf32>
    %cst = arith.constant 1.000000e+00 : f32
    %28 = vector.broadcast %cst : f32 to vector<8x128xf32>
    %29 = arith.divf %28, %27 : vector<8x128xf32>
    %30 = arith.mulf %18, %29 : vector<8x128xf32>
    %c0_i32_16 = arith.constant 0 : i32
    %31 = vector.broadcast %c0_i32_16 : i32 to vector<8x128xi32>
    %32 = arith.cmpi eq, %5, %31 : vector<8x128xi32>
    %33 = arith.extui %32 : vector<8x128xi1> to vector<8x128xi32>
    %34 = arith.sitofp %33 : vector<8x128xi32> to vector<8x128xf32>
    %35 = arith.mulf %30, %34 : vector<8x128xf32>
    %cst_17 = arith.constant dense<0.000000e+00> : vector<128xf32>
    %36 = vector.multi_reduction <add>, %35, %cst_17 [0] : vector<8x128xf32> to vector<128xf32>
    %37 = vector.shape_cast %36 : vector<128xf32> to vector<1x128xf32>
    %cst_18 = arith.constant dense<0.000000e+00> : vector<128xf32>
    %38 = vector.multi_reduction <add>, %30, %cst_18 [0] : vector<8x128xf32> to vector<128xf32>
    %39 = vector.shape_cast %38 : vector<128xf32> to vector<1x128xf32>
    %cst_19 = arith.constant dense<0.000000e+00> : vector<128xf32>
    %40 = vector.multi_reduction <add>, %34, %cst_19 [0] : vector<8x128xf32> to vector<128xf32>
    %41 = vector.shape_cast %40 : vector<128xf32> to vector<1x128xf32>
    %42 = arith.mulf %20, %29 : vector<8x128xf32>
    %c1_i32 = arith.constant 1 : i32
    %43 = vector.broadcast %c1_i32 : i32 to vector<8x128xi32>
    %44 = arith.cmpi eq, %5, %43 : vector<8x128xi32>
    %45 = arith.extui %44 : vector<8x128xi1> to vector<8x128xi32>
    %46 = arith.sitofp %45 : vector<8x128xi32> to vector<8x128xf32>
    %47 = arith.mulf %42, %46 : vector<8x128xf32>
    %cst_20 = arith.constant dense<0.000000e+00> : vector<128xf32>
    %48 = vector.multi_reduction <add>, %47, %cst_20 [0] : vector<8x128xf32> to vector<128xf32>
    %49 = vector.shape_cast %48 : vector<128xf32> to vector<1x128xf32>
    %cst_21 = arith.constant dense<0.000000e+00> : vector<128xf32>
    %50 = vector.multi_reduction <add>, %42, %cst_21 [0] : vector<8x128xf32> to vector<128xf32>
    %51 = vector.shape_cast %50 : vector<128xf32> to vector<1x128xf32>
    %cst_22 = arith.constant dense<0.000000e+00> : vector<128xf32>
    %52 = vector.multi_reduction <add>, %46, %cst_22 [0] : vector<8x128xf32> to vector<128xf32>
    %53 = vector.shape_cast %52 : vector<128xf32> to vector<1x128xf32>
    %54 = arith.mulf %22, %29 : vector<8x128xf32>
    %c2_i32 = arith.constant 2 : i32
    %55 = vector.broadcast %c2_i32 : i32 to vector<8x128xi32>
    %56 = arith.cmpi eq, %5, %55 : vector<8x128xi32>
    %57 = arith.extui %56 : vector<8x128xi1> to vector<8x128xi32>
    %58 = arith.sitofp %57 : vector<8x128xi32> to vector<8x128xf32>
    %59 = arith.mulf %54, %58 : vector<8x128xf32>
    %cst_23 = arith.constant dense<0.000000e+00> : vector<128xf32>
    %60 = vector.multi_reduction <add>, %59, %cst_23 [0] : vector<8x128xf32> to vector<128xf32>
    %61 = vector.shape_cast %60 : vector<128xf32> to vector<1x128xf32>
    %cst_24 = arith.constant dense<0.000000e+00> : vector<128xf32>
    %62 = vector.multi_reduction <add>, %54, %cst_24 [0] : vector<8x128xf32> to vector<128xf32>
    %63 = vector.shape_cast %62 : vector<128xf32> to vector<1x128xf32>
    %cst_25 = arith.constant dense<0.000000e+00> : vector<128xf32>
    %64 = vector.multi_reduction <add>, %58, %cst_25 [0] : vector<8x128xf32> to vector<128xf32>
    %65 = vector.shape_cast %64 : vector<128xf32> to vector<1x128xf32>
    %66 = arith.mulf %24, %29 : vector<8x128xf32>
    %c3_i32 = arith.constant 3 : i32
    %67 = vector.broadcast %c3_i32 : i32 to vector<8x128xi32>
    %68 = arith.cmpi eq, %5, %67 : vector<8x128xi32>
    %69 = arith.extui %68 : vector<8x128xi1> to vector<8x128xi32>
    %70 = arith.sitofp %69 : vector<8x128xi32> to vector<8x128xf32>
    %71 = arith.mulf %66, %70 : vector<8x128xf32>
    %cst_26 = arith.constant dense<0.000000e+00> : vector<128xf32>
    %72 = vector.multi_reduction <add>, %71, %cst_26 [0] : vector<8x128xf32> to vector<128xf32>
    %73 = vector.shape_cast %72 : vector<128xf32> to vector<1x128xf32>
    %cst_27 = arith.constant dense<0.000000e+00> : vector<128xf32>
    %74 = vector.multi_reduction <add>, %66, %cst_27 [0] : vector<8x128xf32> to vector<128xf32>
    %75 = vector.shape_cast %74 : vector<128xf32> to vector<1x128xf32>
    %cst_28 = arith.constant dense<0.000000e+00> : vector<128xf32>
    %76 = vector.multi_reduction <add>, %70, %cst_28 [0] : vector<8x128xf32> to vector<128xf32>
    %77 = vector.shape_cast %76 : vector<128xf32> to vector<1x128xf32>
    %c0_29 = arith.constant 0 : index
    %c0_30 = arith.constant 0 : index
    %c0_31 = arith.constant 0 : index
    %78 = vector.load %arg4[%c0_29, %c0_30, %c0_31] : memref<1x4x128xf32, #tpu.memory_space<vmem>>, vector<1x4x128xf32>
    %79 = vector.shape_cast %78 : vector<1x4x128xf32> to vector<4x128xf32>
    %80 = tpu.concatenate %37, %49, %61, %73 in 0 : vector<1x128xf32>, vector<1x128xf32>, vector<1x128xf32>, vector<1x128xf32> -> vector<4x128xf32>
    %81 = arith.addf %79, %80 : vector<4x128xf32>
    %c0_32 = arith.constant 0 : index
    %c0_33 = arith.constant 0 : index
    %c0_34 = arith.constant 0 : index
    %82 = vector.load %arg4[%c0_32, %c0_33, %c0_34] : memref<1x4x128xf32, #tpu.memory_space<vmem>>, vector<1x4x128xf32>
    %83 = vector.shape_cast %82 : vector<1x4x128xf32> to vector<4x128xf32>
    %84 = vector.shape_cast %81 : vector<4x128xf32> to vector<1x4x128xf32>
    tpu.vector_store %arg4[%c0_32, %c0_33, %c0_34], %84 {strides = array<i32>} : memref<1x4x128xf32, #tpu.memory_space<vmem>>, vector<1x4x128xf32>,
    %c0_35 = arith.constant 0 : index
    %c0_36 = arith.constant 0 : index
    %c0_37 = arith.constant 0 : index
    %85 = vector.load %arg5[%c0_35, %c0_36, %c0_37] : memref<1x4x128xf32, #tpu.memory_space<vmem>>, vector<1x4x128xf32>
    %86 = vector.shape_cast %85 : vector<1x4x128xf32> to vector<4x128xf32>
    %87 = tpu.concatenate %39, %51, %63, %75 in 0 : vector<1x128xf32>, vector<1x128xf32>, vector<1x128xf32>, vector<1x128xf32> -> vector<4x128xf32>
    %88 = arith.addf %86, %87 : vector<4x128xf32>
    %c0_38 = arith.constant 0 : index
    %c0_39 = arith.constant 0 : index
    %c0_40 = arith.constant 0 : index
    %89 = vector.load %arg5[%c0_38, %c0_39, %c0_40] : memref<1x4x128xf32, #tpu.memory_space<vmem>>, vector<1x4x128xf32>
    %90 = vector.shape_cast %89 : vector<1x4x128xf32> to vector<4x128xf32>
    %91 = vector.shape_cast %88 : vector<4x128xf32> to vector<1x4x128xf32>
    tpu.vector_store %arg5[%c0_38, %c0_39, %c0_40], %91 {strides = array<i32>} : memref<1x4x128xf32, #tpu.memory_space<vmem>>, vector<1x4x128xf32>,
    %c0_41 = arith.constant 0 : index
    %c0_42 = arith.constant 0 : index
    %c0_43 = arith.constant 0 : index
    %92 = vector.load %arg6[%c0_41, %c0_42, %c0_43] : memref<1x4x128xf32, #tpu.memory_space<vmem>>, vector<1x4x128xf32>
    %93 = vector.shape_cast %92 : vector<1x4x128xf32> to vector<4x128xf32>
    %94 = tpu.concatenate %41, %53, %65, %77 in 0 : vector<1x128xf32>, vector<1x128xf32>, vector<1x128xf32>, vector<1x128xf32> -> vector<4x128xf32>
    %95 = arith.addf %93, %94 : vector<4x128xf32>
    %c0_44 = arith.constant 0 : index
    %c0_45 = arith.constant 0 : index
    %c0_46 = arith.constant 0 : index
    %96 = vector.load %arg6[%c0_44, %c0_45, %c0_46] : memref<1x4x128xf32, #tpu.memory_space<vmem>>, vector<1x4x128xf32>
    %97 = vector.shape_cast %96 : vector<1x4x128xf32> to vector<4x128xf32>
    %98 = vector.shape_cast %95 : vector<4x128xf32> to vector<1x4x128xf32>
    tpu.vector_store %arg6[%c0_44, %c0_45, %c0_46], %98 {strides = array<i32>} : memref<1x4x128xf32, #tpu.memory_space<vmem>>, vector<1x4x128xf32>,
    return
  }
  func.func @transform_0(%arg0: i32, %arg1: i32) -> (i32, i32, i32, i32) {
    %c0_i32 = arith.constant 0 : i32
    %c0_i32_0 = arith.constant 0 : i32
    %c0_i32_1 = arith.constant 0 : i32
    return %arg0, %c0_i32, %arg1, %c0_i32_0 : i32, i32, i32, i32
  }
  func.func @transform_1(%arg0: i32, %arg1: i32) -> (i32, i32, i32) {
    %c0_i32 = arith.constant 0 : i32
    %c0_i32_0 = arith.constant 0 : i32
    return %arg0, %arg1, %c0_i32 : i32, i32, i32
  }
  func.func @transform_2(%arg0: i32, %arg1: i32) -> (i32, i32, i32) {
    %c0_i32 = arith.constant 0 : i32
    %c0_i32_0 = arith.constant 0 : i32
    %c0_i32_1 = arith.constant 0 : i32
    return %arg0, %c0_i32, %c0_i32_0 : i32, i32, i32
  }
  func.func @transform_3(%arg0: i32, %arg1: i32) -> (i32, i32, i32) {
    %c0_i32 = arith.constant 0 : i32
    %c0_i32_0 = arith.constant 0 : i32
    %c0_i32_1 = arith.constant 0 : i32
    return %arg0, %c0_i32, %c0_i32_0 : i32, i32, i32
  }
  func.func @transform_4(%arg0: i32, %arg1: i32) -> (i32, i32, i32) {
    %c0_i32 = arith.constant 0 : i32
    %c0_i32_0 = arith.constant 0 : i32
    %c0_i32_1 = arith.constant 0 : i32
    return %arg0, %c0_i32, %c0_i32_0 : i32, i32, i32
  }
}

</mosaic_0001>

<llo_original>
// kernel: joint_edge_dice_loss.3
$region0: #{joint_edge_dice_loss.3}
  #allocation0 [shape = 'u32[]', space=smem, size = 0x4, offset = 0x4, fixed_abs, tag = 'smem constant byte address 0x4 - core index']
  #allocation1 [shape = 'u32[144,128]{1,0:T(1,128)}', space=vmem, size = 0x12000, scoped, tag = 'internal scratch']
  %s0 = inlined_call_operand.vmem [shape: f32[2,8,128], index: 0, kind: input, shape index: {}]
  %s1 = inlined_call_operand.vmem [shape: s8[2,8,128], index: 1, kind: input, shape index: {}]
  %s2 = inlined_call_operand.vmem [shape: f32[2,1,128], index: 2, kind: output, shape index: {0}]
  %s3 = inlined_call_operand.vmem [shape: f32[2,1,128], index: 3, kind: output, shape index: {1}]
  %s4 = inlined_call_operand.vmem [shape: f32[2,1,128], index: 4, kind: output, shape index: {2}]
  %s5 = inlined_call_operand.vmem [shape: f32[2,1,128], index: 5, kind: output, shape index: {3}]
  %6 = xla_tuple %s2, %s3, %s4, %s5
  %s7 = sld [smem:[#allocation0]]
  $region69: #{joint_edge_dice_loss.3} parent=0
    _
  %s9 = ssub.s32 1, %s7
  %s10 = scalar_select 0, %s9, %s7
  loop: start=0, step=1, limit=4
  $region2: #{joint_edge_dice_loss.3} parent=0 // loop_pre_header
    _
  $region3: #{joint_edge_dice_loss.3} parent=0 // loop_header
    %s12 = sphi 0, %s16
    %p13 = scmp.ge.s32.totalorder %s12, 4
    %s19 = sphi 0, %s31
    %s20 = sphi 0, %s27
    %s21 = sphi 0, %s19
    %s22 = sphi 0, %s20
    %s23 = sphi 0, %s21
    %s24 = sphi 0, %s22
    %s36 = sphi 0, %s38
    %s39 = sphi 0, %s36
    %s40 = sphi 0, %s39
    %s56 = sphi 0, %s40
    %s64 = sphi 0, %s66
    %s67 = sphi 0, %s64
    %s68 = sphi 0, %s67
    %s84 = sphi 0, %s68
    %s90 = sphi 0, %s92
    %s93 = sphi 0, %s90
    %s94 = sphi 0, %s93
    %s110 = sphi 0, %s94
    %s116 = sphi 0, %s118
    %s119 = sphi 0, %s116
    %s120 = sphi 0, %s119
    %s136 = sphi 0, %s120
    %s142 = sphi 0, %s144
    %s145 = sphi 0, %s142
    %s146 = sphi 0, %s145
    %s162 = sphi 0, %s146
    %s168 = sphi 0, %s170
    %s171 = sphi 0, %s168
    %s172 = sphi 0, %s171
    %s188 = sphi 0, %s172
  $region4: #{joint_edge_dice_loss.3} parent=0 // loop_header_branch
    %15 = sbr.rel (%p13) target = $region8
  $region5: #{joint_edge_dice_loss.3} parent=0 // loop_body
    %s17 = ssub.s32 %s12, 1
    %s18 = ssub.s32 %s12, 2
    %s25 = sadd.s32 1, %s20
    %p26 = scmp.ge.s32.totalorder %s25, 1
    %s27 = scalar_select %p26, 0, %s25
    %s28 = sadd.s32 1, %s19
    %s29 = scalar_select %p26, %s28, %s19
    %p30 = scmp.ge.s32.totalorder %s29, 2
    %s31 = scalar_select %p30, 0, %s29
    %s32 = ssub.s32 %s19, %s31
    %s33 = ssub.s32 %s20, %s27
    %s34 = sor.u32 %s32, %s33
    %p35 = scmp.eq.s32.totalorder %s34, 0
    %s37 = sadd.s32 %s36, 1
    %s38 = scalar_select %p35, %s36, %s37
    %p41 = pneg %p35
    %p42 = scmp.eq.s32.totalorder %s12, 1
    %p43 = por %p41, %p42
    %p44 = scmp.ne.s32.totalorder %s36, %s39
    %p45 = scmp.eq.s32.totalorder %s12, 0
    %p46 = por %p44, %p45
    %p47 = scmp.ne.s32.totalorder %s36, %s39
    %p48 = scmp.eq.s32.totalorder %s17, 1
    %p49 = por %p47, %p48
    %p50 = scmp.ne.s32.totalorder %s39, %s40
    %p51 = scmp.eq.s32.totalorder %s17, 0
    %p52 = por %p50, %p51
    %p53 = scmp.ne.s32.totalorder %s39, %s40
    %p54 = scmp.eq.s32.totalorder %s18, 1
    %p55 = por %p53, %p54
    %p57 = scmp.ne.s32.totalorder %s40, %s56
    %p58 = scmp.eq.s32.totalorder %s18, 0
    %p59 = por %p57, %p58
    %s60 = ssub.s32 %s19, %s31
    %s61 = ssub.s32 %s20, %s27
    %s62 = sor.u32 %s60, %s61
    %p63 = scmp.eq.s32.totalorder %s62, 0
    %s65 = sadd.s32 %s64, 1
    %s66 = scalar_select %p63, %s64, %s65
    %p69 = pneg %p63
    %p70 = scmp.eq.s32.totalorder %s12, 1
    %p71 = por %p69, %p70
    %p72 = scmp.ne.s32.totalorder %s64, %s67
    %p73 = scmp.eq.s32.totalorder %s12, 0
    %p74 = por %p72, %p73
    %p75 = scmp.ne.s32.totalorder %s64, %s67
    %p76 = scmp.eq.s32.totalorder %s17, 1
    %p77 = por %p75, %p76
    %p78 = scmp.ne.s32.totalorder %s67, %s68
    %p79 = scmp.eq.s32.totalorder %s17, 0
    %p80 = por %p78, %p79
    %p81 = scmp.ne.s32.totalorder %s67, %s68
    %p82 = scmp.eq.s32.totalorder %s18, 1
    %p83 = por %p81, %p82
    %p85 = scmp.ne.s32.totalorder %s68, %s84
    %p86 = scmp.eq.s32.totalorder %s18, 0
    %p87 = por %p85, %p86
    %s88 = ssub.s32 %s19, %s31
    %p89 = scmp.eq.s32.totalorder %s88, 0
    %s91 = sadd.s32 %s90, 1
    %s92 = scalar_select %p89, %s90, %s91
    %p95 = pneg %p89
    %p96 = scmp.eq.s32.totalorder %s12, 1
    %p97 = por %p95, %p96
    %p98 = scmp.ne.s32.totalorder %s90, %s93
    %p99 = scmp.eq.s32.totalorder %s12, 0
    %p100 = por %p98, %p99
    %p101 = scmp.ne.s32.totalorder %s90, %s93
    %p102 = scmp.eq.s32.totalorder %s17, 1
    %p103 = por %p101, %p102
    %p104 = scmp.ne.s32.totalorder %s93, %s94
    %p105 = scmp.eq.s32.totalorder %s17, 0
    %p106 = por %p104, %p105
    %p107 = scmp.ne.s32.totalorder %s93, %s94
    %p108 = scmp.eq.s32.totalorder %s18, 1
    %p109 = por %p107, %p108
    %p111 = scmp.ne.s32.totalorder %s94, %s110
    %p112 = scmp.eq.s32.totalorder %s18, 0
    %p113 = por %p111, %p112
    %s114 = ssub.s32 %s19, %s31
    %p115 = scmp.eq.s32.totalorder %s114, 0
    %s117 = sadd.s32 %s116, 1
    %s118 = scalar_select %p115, %s116, %s117
    %p121 = pneg %p115
    %p122 = scmp.eq.s32.totalorder %s12, 1
    %p123 = por %p121, %p122
    %p124 = scmp.ne.s32.totalorder %s116, %s119
    %p125 = scmp.eq.s32.totalorder %s12, 0
    %p126 = por %p124, %p125
    %p127 = scmp.ne.s32.totalorder %s116, %s119
    %p128 = scmp.eq.s32.totalorder %s17, 1
    %p129 = por %p127, %p128
    %p130 = scmp.ne.s32.totalorder %s119, %s120
    %p131 = scmp.eq.s32.totalorder %s17, 0
    %p132 = por %p130, %p131
    %p133 = scmp.ne.s32.totalorder %s119, %s120
    %p134 = scmp.eq.s32.totalorder %s18, 1
    %p135 = por %p133, %p134
    %p137 = scmp.ne.s32.totalorder %s120, %s136
    %p138 = scmp.eq.s32.totalorder %s18, 0
    %p139 = por %p137, %p138
    %s140 = ssub.s32 %s19, %s31
    %p141 = scmp.eq.s32.totalorder %s140, 0
    %s143 = sadd.s32 %s142, 1
    %s144 = scalar_select %p141, %s142, %s143
    %p147 = pneg %p141
    %p148 = scmp.eq.s32.totalorder %s12, 1
    %p149 = por %p147, %p148
    %p150 = scmp.ne.s32.totalorder %s142, %s145
    %p151 = scmp.eq.s32.totalorder %s12, 0
    %p152 = por %p150, %p151
    %p153 = scmp.ne.s32.totalorder %s142, %s145
    %p154 = scmp.eq.s32.totalorder %s17, 1
    %p155 = por %p153, %p154
    %p156 = scmp.ne.s32.totalorder %s145, %s146
    %p157 = scmp.eq.s32.totalorder %s17, 0
    %p158 = por %p156, %p157
    %p159 = scmp.ne.s32.totalorder %s145, %s146
    %p160 = scmp.eq.s32.totalorder %s18, 1
    %p161 = por %p159, %p160
    %p163 = scmp.ne.s32.totalorder %s146, %s162
    %p164 = scmp.eq.s32.totalorder %s18, 0
    %p165 = por %p163, %p164
    %s166 = ssub.s32 %s19, %s31
    %p167 = scmp.eq.s32.totalorder %s166, 0
    %s169 = sadd.s32 %s168, 1
    %s170 = scalar_select %p167, %s168, %s169
    %p173 = pneg %p167
    %p174 = scmp.eq.s32.totalorder %s12, 1
    %p175 = por %p173, %p174
    %p176 = scmp.ne.s32.totalorder %s168, %s171
    %p177 = scmp.eq.s32.totalorder %s12, 0
    %p178 = por %p176, %p177
    %p179 = scmp.ne.s32.totalorder %s168, %s171
    %p180 = scmp.eq.s32.totalorder %s17, 1
    %p181 = por %p179, %p180
    %p182 = scmp.ne.s32.totalorder %s171, %s172
    %p183 = scmp.eq.s32.totalorder %s17, 0
    %p184 = por %p182, %p183
    %p185 = scmp.ne.s32.totalorder %s171, %s172
    %p186 = scmp.eq.s32.totalorder %s18, 1
    %p187 = por %p185, %p186
    %p189 = scmp.ne.s32.totalorder %s172, %s188
    %p190 = scmp.eq.s32.totalorder %s18, 0
    %p191 = por %p189, %p190
    %p192 = scmp.le.s32.totalorder 1, %s12
    %p193 = scmp.lt.s32.totalorder %s12, 3
    %p194 = pnand %p192, %p193
    %p195 = pneg %p194
    // Predicated region
    $region9: #{joint_edge_dice_loss.3} parent=5 // pred_check
      _
    $region10: #{joint_edge_dice_loss.3} parent=5 // pred_check_branch
      %197 = sbr.rel (%p194) target = $region12
    $region11: #{joint_edge_dice_loss.3} parent=5 // pred_region
      %s198 = ssub.s32 %s12, 1
    $region12: #{joint_edge_dice_loss.3} parent=5 // pred_fallthru
      _
    %p199 = scmp.lt.s32.totalorder %s12, 2
    // Predicated region
    $region13: #{joint_edge_dice_loss.3} parent=5 // pred_check
      %p200 = pneg %p199
    $region14: #{joint_edge_dice_loss.3} parent=5 // pred_check_branch
      %202 = sbr.rel (%p200) target = $region16
    $region15: #{joint_edge_dice_loss.3} parent=5 // pred_region
      // Predicated region
      $region17: #{joint_edge_dice_loss.3} parent=15 // pred_check
        %p203 = pneg %p46
      $region18: #{joint_edge_dice_loss.3} parent=15 // pred_check_branch
        %205 = sbr.rel (%p203) target = $region20
      $region19: #{joint_edge_dice_loss.3} parent=15 // pred_region
        %p206 = scmp.lt.s32.totalorder %s19, 1
        %s207 = scalar_select %p206, %s19, 1
        %p208 = scmp.lt.s32.totalorder %s20, 0
        %s209 = scalar_select %p208, %s20, 0
        %s210 = sadd.s32 %s209, %s207
        %s211 = smul.addr %s210, 8
        %s212 = scalar_lea.vmem %s0, %s211
      $region20: #{joint_edge_dice_loss.3} parent=15 // pred_fallthru
        _
      // Predicated region
      $region21: #{joint_edge_dice_loss.3} parent=15 // pred_check
        %p213 = pneg %p74
      $region22: #{joint_edge_dice_loss.3} parent=15 // pred_check_branch
        %215 = sbr.rel (%p213) target = $region24
      $region23: #{joint_edge_dice_loss.3} parent=15 // pred_region
        %p216 = scmp.lt.s32.totalorder %s19, 1
        %s217 = scalar_select %p216, %s19, 1
        %p218 = scmp.lt.s32.totalorder %s20, 0
        %s219 = scalar_select %p218, %s20, 0
        %s220 = sadd.s32 %s219, %s217
        %s221 = smul.addr %s220, 2
        %s222 = scalar_lea.vmem %s1, %s221
      $region24: #{joint_edge_dice_loss.3} parent=15 // pred_fallthru
        _
    $region16: #{joint_edge_dice_loss.3} parent=5 // pred_fallthru
      _
    %p223 = scmp.le.s32.totalorder 1, %s12
    %p224 = scmp.lt.s32.totalorder %s12, 3
    %p225 = pnand %p223, %p224
    %p226 = pneg %p225
    // Predicated region
    $region25: #{joint_edge_dice_loss.3} parent=5 // pred_check
      _
    $region26: #{joint_edge_dice_loss.3} parent=5 // pred_check_branch
      %228 = sbr.rel (%p225) target = $region28
    $region27: #{joint_edge_dice_loss.3} parent=5 // pred_region
      %s229 = ssub.s32 %s12, 1
      %p230 = scmp.lt.s32.totalorder %s21, 1
      %s231 = scalar_select %p230, %s21, 1
      %p232 = scmp.lt.s32.totalorder %s22, 0
      %s233 = scalar_select %p232, %s22, 0
      %s234 = sadd.s32 %s233, %s231
      %s235 = smul.addr %s234, 8
      %s236 = scalar_lea.vmem %s0, %s235
      %p237 = pneg %p52
      %p238 = pneg %p49
      %p239 = scmp.lt.s32.totalorder %s21, 1
      %s240 = scalar_select %p239, %s21, 1
      %p241 = scmp.lt.s32.totalorder %s22, 0
      %s242 = scalar_select %p241, %s22, 0
      %s243 = sadd.s32 %s242, %s240
      %s244 = smul.addr %s243, 2
      %s245 = scalar_lea.vmem %s1, %s244
      %p246 = pneg %p80
      %p247 = pneg %p77
      %p248 = pneg %p106
      %p249 = pneg %p103
      %p250 = scmp.lt.s32.totalorder %s21, 1
      %s251 = scalar_select %p250, %s21, 1
      %s252 = scalar_lea.vmem %s2, %s251
      %p253 = pneg %p132
      %p254 = pneg %p129
      %p255 = scmp.lt.s32.totalorder %s21, 1
      %s256 = scalar_select %p255, %s21, 1
      %s257 = scalar_lea.vmem %s3, %s256
      %p258 = pneg %p158
      %p259 = pneg %p155
      %p260 = scmp.lt.s32.totalorder %s21, 1
      %s261 = scalar_select %p260, %s21, 1
      %s262 = scalar_lea.vmem %s4, %s261
      %p263 = pneg %p184
      %p264 = pneg %p181
      %p265 = scmp.lt.s32.totalorder %s21, 1
      %s266 = scalar_select %p265, %s21, 1
      %s267 = scalar_lea.vmem %s5, %s266
      %p268 = scmp.lt.s32.totalorder %s21, 1
      %s269 = scalar_select %p268, %s21, 1
      %p270 = scmp.lt.s32.totalorder %s22, 0
      %s271 = scalar_select %p270, %s22, 0
      %s272 = sadd.s32 %s271, %s269
      %s273 = smul.addr %s272, 8
      %s274 = scalar_lea.vmem %s0, %s273
      %p275 = scmp.lt.s32.totalorder %s21, 1
      %s276 = scalar_select %p275, %s21, 1
      %p277 = scmp.lt.s32.totalorder %s22, 0
      %s278 = scalar_select %p277, %s22, 0
      %s279 = sadd.s32 %s278, %s276
      %s280 = smul.addr %s279, 2
      %s281 = scalar_lea.vmem %s1, %s280
      %p282 = scmp.lt.s32.totalorder %s21, 1
      %s283 = scalar_select %p282, %s21, 1
      %s284 = scalar_lea.vmem %s2, %s283
      %p285 = scmp.lt.s32.totalorder %s21, 1
      %s286 = scalar_select %p285, %s21, 1
      %s287 = scalar_lea.vmem %s3, %s286
      %p288 = scmp.lt.s32.totalorder %s21, 1
      %s289 = scalar_select %p288, %s21, 1
      %s290 = scalar_lea.vmem %s4, %s289
      %p291 = scmp.lt.s32.totalorder %s21, 1
      %s292 = scalar_select %p291, %s21, 1
      %s293 = scalar_lea.vmem %s5, %s292
      %p294 = scmp.eq.s32.totalorder %s22, 0
      // Predicated region
      $region29: #{joint_edge_dice_loss.3} parent=27 // pred_check
        %p295 = pneg %p294
      $region30: #{joint_edge_dice_loss.3} parent=27 // pred_check_branch
        %297 = sbr.rel (%p295) target = $region32
      $region31: #{joint_edge_dice_loss.3} parent=27 // pred_region
        %298 = vst [vmem:[%s284] sm:$0x1] 0.0
        %299 = vst [vmem:[%s287] sm:$0x1] 0.0
        %300 = vst [vmem:[%s290] sm:$0x1] 0.0
        %301 = vst [vmem:[%s293] sm:$0x1] 0.0
      $region32: #{joint_edge_dice_loss.3} parent=27 // pred_fallthru
        _
      %v302 = vld [vmem:[%s274] sm:$0xff]
      %v303 = vld [vmem:[%s281] sm:$0x3]
      %v304 = vunpack.c.0.s8 %v303
      %vm305 = vcmp.eq.s32.totalorder %v304, 1
      %v306 = vsel %vm305, 1, 0
      %v307 = vcvt.s32.f32 %v306
      %vm308 = vcmp.eq.s32.totalorder %v304, 0
      %v309 = vsel %vm308, 1, 0
      %v310 = vcvt.s32.f32 %v309
      %v311 = vmax.f32 %v302, 0.0
      %v312 = vmul.f32 %v302, %v307
      %v313 = vsub.f32 %v311, %v312
      %v314 = vand.u32 2147483647, %v302
      %v315 = vsub.f32 0.0, %v314
      %v316 = vmul.f32 %v315, 1.442695
      %v317 = vpow.pop %v316
      %v318 = vadd.f32 %v317, 1.0
      %v319 = vlog2.pop %v318
      %v320 = vmul.f32 %v319, 0.6931472
      %v321 = vadd.f32 %v313, %v320
      %v322 = vld [vmem:[%s284] sm:$0x1]
      %v323 = vrot.slane %v307, 4
      %v324 = vadd.f32 %v307, %v323
      %v325 = vrot.slane %v324, 2
      %v326 = vadd.f32 %v324, %v325
      %v327 = vrot.slane %v326, 1
      %v328 = vadd.f32 %v326, %v327
      %v329 = vadd.f32 %v322, %v328
      %330 = vst [vmem:[%s284] sm:$0x1] %v329
      %v331 = vld [vmem:[%s287] sm:$0x1]
      %v332 = vrot.slane %v310, 4
      %v333 = vadd.f32 %v310, %v332
      %v334 = vrot.slane %v333, 2
      %v335 = vadd.f32 %v333, %v334
      %v336 = vrot.slane %v335, 1
      %v337 = vadd.f32 %v335, %v336
      %v338 = vadd.f32 %v331, %v337
      %339 = vst [vmem:[%s287] sm:$0x1] %v338
      %v340 = vld [vmem:[%s290] sm:$0x1]
      %v341 = vmul.f32 %v321, %v307
      %v342 = vrot.slane %v341, 4
      %v343 = vadd.f32 %v341, %v342
      %v344 = vrot.slane %v343, 2
      %v345 = vadd.f32 %v343, %v344
      %v346 = vrot.slane %v345, 1
      %v347 = vadd.f32 %v345, %v346
      %v348 = vadd.f32 %v340, %v347
      %349 = vst [vmem:[%s290] sm:$0x1] %v348
      %v350 = vld [vmem:[%s293] sm:$0x1]
      %v351 = vmul.f32 %v321, %v310
      %v352 = vrot.slane %v351, 4
      %v353 = vadd.f32 %v351, %v352
      %v354 = vrot.slane %v353, 2
      %v355 = vadd.f32 %v353, %v354
      %v356 = vrot.slane %v355, 1
      %v357 = vadd.f32 %v355, %v356
      %v358 = vadd.f32 %v350, %v357
      %359 = vst [vmem:[%s293] sm:$0x1] %v358
      %p360 = scmp.lt.s32.totalorder %s21, 1
      %s361 = scalar_select %p360, %s21, 1
      %s362 = scalar_lea.vmem %s2, %s361
      %p363 = scmp.lt.s32.totalorder %s21, 1
      %s364 = scalar_select %p363, %s21, 1
      %s365 = scalar_lea.vmem %s3, %s364
      %p366 = scmp.lt.s32.totalorder %s21, 1
      %s367 = scalar_select %p366, %s21, 1
      %s368 = scalar_lea.vmem %s4, %s367
      %p369 = scmp.lt.s32.totalorder %s21, 1
      %s370 = scalar_select %p369, %s21, 1
      %s371 = scalar_lea.vmem %s5, %s370
      // Predicated region
      $region33: #{joint_edge_dice_loss.3} parent=27 // pred_check
        %p372 = pneg %p103
      $region34: #{joint_edge_dice_loss.3} parent=27 // pred_check_branch
        %374 = sbr.rel (%p372) target = $region36
      $region35: #{joint_edge_dice_loss.3} parent=27 // pred_region
        _
      $region36: #{joint_edge_dice_loss.3} parent=27 // pred_fallthru
        _
      // Predicated region
      $region37: #{joint_edge_dice_loss.3} parent=27 // pred_check
        %p375 = pneg %p129
      $region38: #{joint_edge_dice_loss.3} parent=27 // pred_check_branch
        %377 = sbr.rel (%p375) target = $region40
      $region39: #{joint_edge_dice_loss.3} parent=27 // pred_region
        _
      $region40: #{joint_edge_dice_loss.3} parent=27 // pred_fallthru
        _
      // Predicated region
      $region41: #{joint_edge_dice_loss.3} parent=27 // pred_check
        %p378 = pneg %p155
      $region42: #{joint_edge_dice_loss.3} parent=27 // pred_check_branch
        %380 = sbr.rel (%p378) target = $region44
      $region43: #{joint_edge_dice_loss.3} parent=27 // pred_region
        _
      $region44: #{joint_edge_dice_loss.3} parent=27 // pred_fallthru
        _
      // Predicated region
      $region45: #{joint_edge_dice_loss.3} parent=27 // pred_check
        %p381 = pneg %p181
      $region46: #{joint_edge_dice_loss.3} parent=27 // pred_check_branch
        %383 = sbr.rel (%p381) target = $region48
      $region47: #{joint_edge_dice_loss.3} parent=27 // pred_region
        _
      $region48: #{joint_edge_dice_loss.3} parent=27 // pred_fallthru
        _
    $region28: #{joint_edge_dice_loss.3} parent=5 // pred_fallthru
      _
    %p384 = scmp.le.s32.totalorder 2, %s12
    // Predicated region
    $region49: #{joint_edge_dice_loss.3} parent=5 // pred_check
      %p385 = pneg %p384
    $region50: #{joint_edge_dice_loss.3} parent=5 // pred_check_branch
      %387 = sbr.rel (%p385) target = $region52
    $region51: #{joint_edge_dice_loss.3} parent=5 // pred_region
      %s388 = ssub.s32 %s12, 2
      // Predicated region
      $region53: #{joint_edge_dice_loss.3} parent=51 // pred_check
        %p389 = pneg %p109
      $region54: #{joint_edge_dice_loss.3} parent=51 // pred_check_branch
        %391 = sbr.rel (%p389) target = $region56
      $region55: #{joint_edge_dice_loss.3} parent=51 // pred_region
        %p392 = scmp.lt.s32.totalorder %s23, 1
        %s393 = scalar_select %p392, %s23, 1
        %s394 = scalar_lea.vmem %s2, %s393
      $region56: #{joint_edge_dice_loss.3} parent=51 // pred_fallthru
        _
      // Predicated region
      $region57: #{joint_edge_dice_loss.3} parent=51 // pred_check
        %p395 = pneg %p135
      $region58: #{joint_edge_dice_loss.3} parent=51 // pred_check_branch
        %397 = sbr.rel (%p395) target = $region60
      $region59: #{joint_edge_dice_loss.3} parent=51 // pred_region
        %p398 = scmp.lt.s32.totalorder %s23, 1
        %s399 = scalar_select %p398, %s23, 1
        %s400 = scalar_lea.vmem %s3, %s399
      $region60: #{joint_edge_dice_loss.3} parent=51 // pred_fallthru
        _
      // Predicated region
      $region61: #{joint_edge_dice_loss.3} parent=51 // pred_check
        %p401 = pneg %p161
      $region62: #{joint_edge_dice_loss.3} parent=51 // pred_check_branch
        %403 = sbr.rel (%p401) target = $region64
      $region63: #{joint_edge_dice_loss.3} parent=51 // pred_region
        %p404 = scmp.lt.s32.totalorder %s23, 1
        %s405 = scalar_select %p404, %s23, 1
        %s406 = scalar_lea.vmem %s4, %s405
      $region64: #{joint_edge_dice_loss.3} parent=51 // pred_fallthru
        _
      // Predicated region
      $region65: #{joint_edge_dice_loss.3} parent=51 // pred_check
        %p407 = pneg %p187
      $region66: #{joint_edge_dice_loss.3} parent=51 // pred_check_branch
        %409 = sbr.rel (%p407) target = $region68
      $region67: #{joint_edge_dice_loss.3} parent=51 // pred_region
        %p410 = scmp.lt.s32.totalorder %s23, 1
        %s411 = scalar_select %p410, %s23, 1
        %s412 = scalar_lea.vmem %s5, %s411
      $region68: #{joint_edge_dice_loss.3} parent=51 // pred_fallthru
        _
    $region52: #{joint_edge_dice_loss.3} parent=5 // pred_fallthru
      _
  $region6: #{joint_edge_dice_loss.3} parent=0 // loop_footer
    %s16 = sadd.s32 1, %s12
  $region7: #{joint_edge_dice_loss.3} parent=0 // loop_footer_branch
    %11 = sbr.rel target = $region3
  $region8: #{joint_edge_dice_loss.3} parent=0 // loop_exit
    _

// kernel: joint_edge_dice_loss.2
$region0: #{joint_edge_dice_loss.2}
  #allocation0 [shape = 'u32[]', space=smem, size = 0x4, offset = 0x4, fixed_abs, tag = 'smem constant byte address 0x4 - core index']
  #allocation1 [shape = 'u32[144,128]{1,0:T(1,128)}', space=vmem, size = 0x12000, scoped, tag = 'internal scratch']
  %s0 = inlined_call_operand.vmem [shape: f32[2,4,8,128], index: 0, kind: input, shape index: {}]
  %s1 = inlined_call_operand.vmem [shape: s8[2,8,128], index: 1, kind: input, shape index: {}]
  %s2 = inlined_call_operand.vmem [shape: f32[2,4,128], index: 2, kind: output, shape index: {0}]
  %s3 = inlined_call_operand.vmem [shape: f32[2,4,128], index: 3, kind: output, shape index: {1}]
  %s4 = inlined_call_operand.vmem [shape: f32[2,4,128], index: 4, kind: output, shape index: {2}]
  %5 = xla_tuple %s2, %s3, %s4
  %s6 = sld [smem:[#allocation0]]
  $region61: #{joint_edge_dice_loss.2} parent=0
    _
  %s8 = ssub.s32 1, %s6
  %s9 = scalar_select 0, %s8, %s6
  loop: start=0, step=1, limit=4
  $region2: #{joint_edge_dice_loss.2} parent=0 // loop_pre_header
    _
  $region3: #{joint_edge_dice_loss.2} parent=0 // loop_header
    %s11 = sphi 0, %s15
    %p12 = scmp.ge.s32.totalorder %s11, 4
    %s18 = sphi 0, %s30
    %s19 = sphi 0, %s26
    %s20 = sphi 0, %s18
    %s21 = sphi 0, %s19
    %s22 = sphi 0, %s20
    %s23 = sphi 0, %s21
    %s35 = sphi 0, %s37
    %s38 = sphi 0, %s35
    %s39 = sphi 0, %s38
    %s55 = sphi 0, %s39
    %s63 = sphi 0, %s65
    %s66 = sphi 0, %s63
    %s67 = sphi 0, %s66
    %s83 = sphi 0, %s67
    %s89 = sphi 0, %s91
    %s92 = sphi 0, %s89
    %s93 = sphi 0, %s92
    %s109 = sphi 0, %s93
    %s115 = sphi 0, %s117
    %s118 = sphi 0, %s115
    %s119 = sphi 0, %s118
    %s135 = sphi 0, %s119
    %s141 = sphi 0, %s143
    %s144 = sphi 0, %s141
    %s145 = sphi 0, %s144
    %s161 = sphi 0, %s145
  $region4: #{joint_edge_dice_loss.2} parent=0 // loop_header_branch
    %14 = sbr.rel (%p12) target = $region8
  $region5: #{joint_edge_dice_loss.2} parent=0 // loop_body
    %s16 = ssub.s32 %s11, 1
    %s17 = ssub.s32 %s11, 2
    %s24 = sadd.s32 1, %s19
    %p25 = scmp.ge.s32.totalorder %s24, 1
    %s26 = scalar_select %p25, 0, %s24
    %s27 = sadd.s32 1, %s18
    %s28 = scalar_select %p25, %s27, %s18
    %p29 = scmp.ge.s32.totalorder %s28, 2
    %s30 = scalar_select %p29, 0, %s28
    %s31 = ssub.s32 %s18, %s30
    %s32 = ssub.s32 %s19, %s26
    %s33 = sor.u32 %s31, %s32
    %p34 = scmp.eq.s32.totalorder %s33, 0
    %s36 = sadd.s32 %s35, 1
    %s37 = scalar_select %p34, %s35, %s36
    %p40 = pneg %p34
    %p41 = scmp.eq.s32.totalorder %s11, 1
    %p42 = por %p40, %p41
    %p43 = scmp.ne.s32.totalorder %s35, %s38
    %p44 = scmp.eq.s32.totalorder %s11, 0
    %p45 = por %p43, %p44
    %p46 = scmp.ne.s32.totalorder %s35, %s38
    %p47 = scmp.eq.s32.totalorder %s16, 1
    %p48 = por %p46, %p47
    %p49 = scmp.ne.s32.totalorder %s38, %s39
    %p50 = scmp.eq.s32.totalorder %s16, 0
    %p51 = por %p49, %p50
    %p52 = scmp.ne.s32.totalorder %s38, %s39
    %p53 = scmp.eq.s32.totalorder %s17, 1
    %p54 = por %p52, %p53
    %p56 = scmp.ne.s32.totalorder %s39, %s55
    %p57 = scmp.eq.s32.totalorder %s17, 0
    %p58 = por %p56, %p57
    %s59 = ssub.s32 %s18, %s30
    %s60 = ssub.s32 %s19, %s26
    %s61 = sor.u32 %s59, %s60
    %p62 = scmp.eq.s32.totalorder %s61, 0
    %s64 = sadd.s32 %s63, 1
    %s65 = scalar_select %p62, %s63, %s64
    %p68 = pneg %p62
    %p69 = scmp.eq.s32.totalorder %s11, 1
    %p70 = por %p68, %p69
    %p71 = scmp.ne.s32.totalorder %s63, %s66
    %p72 = scmp.eq.s32.totalorder %s11, 0
    %p73 = por %p71, %p72
    %p74 = scmp.ne.s32.totalorder %s63, %s66
    %p75 = scmp.eq.s32.totalorder %s16, 1
    %p76 = por %p74, %p75
    %p77 = scmp.ne.s32.totalorder %s66, %s67
    %p78 = scmp.eq.s32.totalorder %s16, 0
    %p79 = por %p77, %p78
    %p80 = scmp.ne.s32.totalorder %s66, %s67
    %p81 = scmp.eq.s32.totalorder %s17, 1
    %p82 = por %p80, %p81
    %p84 = scmp.ne.s32.totalorder %s67, %s83
    %p85 = scmp.eq.s32.totalorder %s17, 0
    %p86 = por %p84, %p85
    %s87 = ssub.s32 %s18, %s30
    %p88 = scmp.eq.s32.totalorder %s87, 0
    %s90 = sadd.s32 %s89, 1
    %s91 = scalar_select %p88, %s89, %s90
    %p94 = pneg %p88
    %p95 = scmp.eq.s32.totalorder %s11, 1
    %p96 = por %p94, %p95
    %p97 = scmp.ne.s32.totalorder %s89, %s92
    %p98 = scmp.eq.s32.totalorder %s11, 0
    %p99 = por %p97, %p98
    %p100 = scmp.ne.s32.totalorder %s89, %s92
    %p101 = scmp.eq.s32.totalorder %s16, 1
    %p102 = por %p100, %p101
    %p103 = scmp.ne.s32.totalorder %s92, %s93
    %p104 = scmp.eq.s32.totalorder %s16, 0
    %p105 = por %p103, %p104
    %p106 = scmp.ne.s32.totalorder %s92, %s93
    %p107 = scmp.eq.s32.totalorder %s17, 1
    %p108 = por %p106, %p107
    %p110 = scmp.ne.s32.totalorder %s93, %s109
    %p111 = scmp.eq.s32.totalorder %s17, 0
    %p112 = por %p110, %p111
    %s113 = ssub.s32 %s18, %s30
    %p114 = scmp.eq.s32.totalorder %s113, 0
    %s116 = sadd.s32 %s115, 1
    %s117 = scalar_select %p114, %s115, %s116
    %p120 = pneg %p114
    %p121 = scmp.eq.s32.totalorder %s11, 1
    %p122 = por %p120, %p121
    %p123 = scmp.ne.s32.totalorder %s115, %s118
    %p124 = scmp.eq.s32.totalorder %s11, 0
    %p125 = por %p123, %p124
    %p126 = scmp.ne.s32.totalorder %s115, %s118
    %p127 = scmp.eq.s32.totalorder %s16, 1
    %p128 = por %p126, %p127
    %p129 = scmp.ne.s32.totalorder %s118, %s119
    %p130 = scmp.eq.s32.totalorder %s16, 0
    %p131 = por %p129, %p130
    %p132 = scmp.ne.s32.totalorder %s118, %s119
    %p133 = scmp.eq.s32.totalorder %s17, 1
    %p134 = por %p132, %p133
    %p136 = scmp.ne.s32.totalorder %s119, %s135
    %p137 = scmp.eq.s32.totalorder %s17, 0
    %p138 = por %p136, %p137
    %s139 = ssub.s32 %s18, %s30
    %p140 = scmp.eq.s32.totalorder %s139, 0
    %s142 = sadd.s32 %s141, 1
    %s143 = scalar_select %p140, %s141, %s142
    %p146 = pneg %p140
    %p147 = scmp.eq.s32.totalorder %s11, 1
    %p148 = por %p146, %p147
    %p149 = scmp.ne.s32.totalorder %s141, %s144
    %p150 = scmp.eq.s32.totalorder %s11, 0
    %p151 = por %p149, %p150
    %p152 = scmp.ne.s32.totalorder %s141, %s144
    %p153 = scmp.eq.s32.totalorder %s16, 1
    %p154 = por %p152, %p153
    %p155 = scmp.ne.s32.totalorder %s144, %s145
    %p156 = scmp.eq.s32.totalorder %s16, 0
    %p157 = por %p155, %p156
    %p158 = scmp.ne.s32.totalorder %s144, %s145
    %p159 = scmp.eq.s32.totalorder %s17, 1
    %p160 = por %p158, %p159
    %p162 = scmp.ne.s32.totalorder %s145, %s161
    %p163 = scmp.eq.s32.totalorder %s17, 0
    %p164 = por %p162, %p163
    %p165 = scmp.le.s32.totalorder 1, %s11
    %p166 = scmp.lt.s32.totalorder %s11, 3
    %p167 = pnand %p165, %p166
    %p168 = pneg %p167
    // Predicated region
    $region9: #{joint_edge_dice_loss.2} parent=5 // pred_check
      _
    $region10: #{joint_edge_dice_loss.2} parent=5 // pred_check_branch
      %170 = sbr.rel (%p167) target = $region12
    $region11: #{joint_edge_dice_loss.2} parent=5 // pred_region
      %s171 = ssub.s32 %s11, 1
    $region12: #{joint_edge_dice_loss.2} parent=5 // pred_fallthru
      _
    %p172 = scmp.lt.s32.totalorder %s11, 2
    // Predicated region
    $region13: #{joint_edge_dice_loss.2} parent=5 // pred_check
      %p173 = pneg %p172
    $region14: #{joint_edge_dice_loss.2} parent=5 // pred_check_branch
      %175 = sbr.rel (%p173) target = $region16
    $region15: #{joint_edge_dice_loss.2} parent=5 // pred_region
      // Predicated region
      $region17: #{joint_edge_dice_loss.2} parent=15 // pred_check
        %p176 = pneg %p45
      $region18: #{joint_edge_dice_loss.2} parent=15 // pred_check_branch
        %178 = sbr.rel (%p176) target = $region20
      $region19: #{joint_edge_dice_loss.2} parent=15 // pred_region
        %p179 = scmp.lt.s32.totalorder %s18, 1
        %s180 = scalar_select %p179, %s18, 1
        %p181 = scmp.lt.s32.totalorder %s19, 0
        %s182 = scalar_select %p181, %s19, 0
        %s183 = smul.addr %s180, 4
        %s184 = sadd.s32 %s182, %s183
        %s185 = smul.addr %s184, 8
        %s186 = scalar_lea.vmem %s0, %s185
      $region20: #{joint_edge_dice_loss.2} parent=15 // pred_fallthru
        _
      // Predicated region
      $region21: #{joint_edge_dice_loss.2} parent=15 // pred_check
        %p187 = pneg %p73
      $region22: #{joint_edge_dice_loss.2} parent=15 // pred_check_branch
        %189 = sbr.rel (%p187) target = $region24
      $region23: #{joint_edge_dice_loss.2} parent=15 // pred_region
        %p190 = scmp.lt.s32.totalorder %s18, 1
        %s191 = scalar_select %p190, %s18, 1
        %p192 = scmp.lt.s32.totalorder %s19, 0
        %s193 = scalar_select %p192, %s19, 0
        %s194 = sadd.s32 %s193, %s191
        %s195 = smul.addr %s194, 2
        %s196 = scalar_lea.vmem %s1, %s195
      $region24: #{joint_edge_dice_loss.2} parent=15 // pred_fallthru
        _
    $region16: #{joint_edge_dice_loss.2} parent=5 // pred_fallthru
      _
    %p197 = scmp.le.s32.totalorder 1, %s11
    %p198 = scmp.lt.s32.totalorder %s11, 3
    %p199 = pnand %p197, %p198
    %p200 = pneg %p199
    // Predicated region
    $region25: #{joint_edge_dice_loss.2} parent=5 // pred_check
      _
    $region26: #{joint_edge_dice_loss.2} parent=5 // pred_check_branch
      %202 = sbr.rel (%p199) target = $region28
    $region27: #{joint_edge_dice_loss.2} parent=5 // pred_region
      %s203 = ssub.s32 %s11, 1
      %p204 = scmp.lt.s32.totalorder %s20, 1
      %s205 = scalar_select %p204, %s20, 1
      %p206 = scmp.lt.s32.totalorder %s21, 0
      %s207 = scalar_select %p206, %s21, 0
      %s208 = smul.addr %s205, 4
      %s209 = sadd.s32 %s207, %s208
      %s210 = smul.addr %s209, 8
      %s211 = scalar_lea.vmem %s0, %s210
      %p212 = pneg %p51
      %p213 = pneg %p48
      %p214 = scmp.lt.s32.totalorder %s20, 1
      %s215 = scalar_select %p214, %s20, 1
      %p216 = scmp.lt.s32.totalorder %s21, 0
      %s217 = scalar_select %p216, %s21, 0
      %s218 = sadd.s32 %s217, %s215
      %s219 = smul.addr %s218, 2
      %s220 = scalar_lea.vmem %s1, %s219
      %p221 = pneg %p79
      %p222 = pneg %p76
      %p223 = pneg %p105
      %p224 = pneg %p102
      %p225 = scmp.lt.s32.totalorder %s20, 1
      %s226 = scalar_select %p225, %s20, 1
      %s227 = smul.addr %s226, 4
      %s228 = scalar_lea.vmem %s2, %s227
      %p229 = pneg %p131
      %p230 = pneg %p128
      %p231 = scmp.lt.s32.totalorder %s20, 1
      %s232 = scalar_select %p231, %s20, 1
      %s233 = smul.addr %s232, 4
      %s234 = scalar_lea.vmem %s3, %s233
      %p235 = pneg %p157
      %p236 = pneg %p154
      %p237 = scmp.lt.s32.totalorder %s20, 1
      %s238 = scalar_select %p237, %s20, 1
      %s239 = smul.addr %s238, 4
      %s240 = scalar_lea.vmem %s4, %s239
      %p241 = scmp.lt.s32.totalorder %s20, 1
      %s242 = scalar_select %p241, %s20, 1
      %p243 = scmp.lt.s32.totalorder %s21, 0
      %s244 = scalar_select %p243, %s21, 0
      %s245 = smul.addr %s242, 4
      %s246 = sadd.s32 %s244, %s245
      %s247 = smul.addr %s246, 8
      %s248 = scalar_lea.vmem %s0, %s247
      %p249 = scmp.lt.s32.totalorder %s20, 1
      %s250 = scalar_select %p249, %s20, 1
      %p251 = scmp.lt.s32.totalorder %s21, 0
      %s252 = scalar_select %p251, %s21, 0
      %s253 = sadd.s32 %s252, %s250
      %s254 = smul.addr %s253, 2
      %s255 = scalar_lea.vmem %s1, %s254
      %p256 = scmp.lt.s32.totalorder %s20, 1
      %s257 = scalar_select %p256, %s20, 1
      %s258 = smul.addr %s257, 4
      %s259 = scalar_lea.vmem %s2, %s258
      %p260 = scmp.lt.s32.totalorder %s20, 1
      %s261 = scalar_select %p260, %s20, 1
      %s262 = smul.addr %s261, 4
      %s263 = scalar_lea.vmem %s3, %s262
      %p264 = scmp.lt.s32.totalorder %s20, 1
      %s265 = scalar_select %p264, %s20, 1
      %s266 = smul.addr %s265, 4
      %s267 = scalar_lea.vmem %s4, %s266
      %p268 = scmp.eq.s32.totalorder %s21, 0
      // Predicated region
      $region29: #{joint_edge_dice_loss.2} parent=27 // pred_check
        %p269 = pneg %p268
      $region30: #{joint_edge_dice_loss.2} parent=27 // pred_check_branch
        %271 = sbr.rel (%p269) target = $region32
      $region31: #{joint_edge_dice_loss.2} parent=27 // pred_region
        %272 = vst [vmem:[%s259] sm:$0xf] 0.0
        %273 = vst [vmem:[%s263] sm:$0xf] 0.0
        %274 = vst [vmem:[%s267] sm:$0xf] 0.0
      $region32: #{joint_edge_dice_loss.2} parent=27 // pred_fallthru
        _
      %v275 = vld [vmem:[%s255] sm:$0x3]
      %v276 = vunpack.c.0.s8 %v275
      %v277 = vld [vmem:[%s248] sm:$0xff]
      %s278 = scalar_lea.vmem %s248, 8
      %v279 = vld [vmem:[%s278] sm:$0xff]
      %s280 = scalar_lea.vmem %s248, 16
      %v281 = vld [vmem:[%s280] sm:$0xff]
      %s282 = scalar_lea.vmem %s248, 24
      %v283 = vld [vmem:[%s282] sm:$0xff]
      %v284 = vmax.f32 %v277, %v279
      %v285 = vmax.f32 %v284, %v281
      %v286 = vmax.f32 %v285, %v283
      %v287 = vsub.f32 %v277, %v286
      %v288 = vmul.f32 %v287, 1.442695
      %v289 = vpow.pop %v288
      %v290 = vsub.f32 %v279, %v286
      %v291 = vmul.f32 %v290, 1.442695
      %v292 = vpow.pop %v291
      %v293 = vsub.f32 %v281, %v286
      %v294 = vmul.f32 %v293, 1.442695
      %v295 = vpow.pop %v294
      %v296 = vsub.f32 %v283, %v286
      %v297 = vmul.f32 %v296, 1.442695
      %v298 = vpow.pop %v297
      %v299 = vadd.f32 %v289, %v292
      %v300 = vadd.f32 %v299, %v295
      %v301 = vadd.f32 %v300, %v298
      %v302 = vrcp.pop %v301
      %v303 = vmul.f32 1.0, %v302
      %v304 = vmul.f32 %v289, %v303
      %vm305 = vcmp.eq.s32.totalorder %v276, 0
      %v306 = vsel %vm305, 1, 0
      %v307 = vcvt.s32.f32 %v306
      %v308 = vmul.f32 %v304, %v307
      %v309 = vrot.slane %v308, 4
      %v310 = vadd.f32 %v308, %v309
      %v311 = vrot.slane %v310, 2
      %v312 = vadd.f32 %v310, %v311
      %v313 = vrot.slane %v312, 1
      %v314 = vadd.f32 %v312, %v313
      %v315 = vrot.slane %v304, 4
      %v316 = vadd.f32 %v304, %v315
      %v317 = vrot.slane %v316, 2
      %v318 = vadd.f32 %v316, %v317
      %v319 = vrot.slane %v318, 1
      %v320 = vadd.f32 %v318, %v319
      %v321 = vrot.slane %v307, 4
      %v322 = vadd.f32 %v307, %v321
      %v323 = vrot.slane %v322, 2
      %v324 = vadd.f32 %v322, %v323
      %v325 = vrot.slane %v324, 1
      %v326 = vadd.f32 %v324, %v325
      %v327 = vmul.f32 %v292, %v303
      %vm328 = vcmp.eq.s32.totalorder %v276, 1
      %v329 = vsel %vm328, 1, 0
      %v330 = vcvt.s32.f32 %v329
      %v331 = vmul.f32 %v327, %v330
      %v332 = vrot.slane %v331, 4
      %v333 = vadd.f32 %v331, %v332
      %v334 = vrot.slane %v333, 2
      %v335 = vadd.f32 %v333, %v334
      %v336 = vrot.slane %v335, 1
      %v337 = vadd.f32 %v335, %v336
      %v338 = vrot.slane %v327, 4
      %v339 = vadd.f32 %v327, %v338
      %v340 = vrot.slane %v339, 2
      %v341 = vadd.f32 %v339, %v340
      %v342 = vrot.slane %v341, 1
      %v343 = vadd.f32 %v341, %v342
      %v344 = vrot.slane %v330, 4
      %v345 = vadd.f32 %v330, %v344
      %v346 = vrot.slane %v345, 2
      %v347 = vadd.f32 %v345, %v346
      %v348 = vrot.slane %v347, 1
      %v349 = vadd.f32 %v347, %v348
      %v350 = vmul.f32 %v295, %v303
      %vm351 = vcmp.eq.s32.totalorder %v276, 2
      %v352 = vsel %vm351, 1, 0
      %v353 = vcvt.s32.f32 %v352
      %v354 = vmul.f32 %v350, %v353
      %v355 = vrot.slane %v354, 4
      %v356 = vadd.f32 %v354, %v355
      %v357 = vrot.slane %v356, 2
      %v358 = vadd.f32 %v356, %v357
      %v359 = vrot.slane %v358, 1
      %v360 = vadd.f32 %v358, %v359
      %v361 = vrot.slane %v350, 4
      %v362 = vadd.f32 %v350, %v361
      %v363 = vrot.slane %v362, 2
      %v364 = vadd.f32 %v362, %v363
      %v365 = vrot.slane %v364, 1
      %v366 = vadd.f32 %v364, %v365
      %v367 = vrot.slane %v353, 4
      %v368 = vadd.f32 %v353, %v367
      %v369 = vrot.slane %v368, 2
      %v370 = vadd.f32 %v368, %v369
      %v371 = vrot.slane %v370, 1
      %v372 = vadd.f32 %v370, %v371
      %v373 = vmul.f32 %v298, %v303
      %vm374 = vcmp.eq.s32.totalorder %v276, 3
      %v375 = vsel %vm374, 1, 0
      %v376 = vcvt.s32.f32 %v375
      %v377 = vmul.f32 %v373, %v376
      %v378 = vrot.slane %v377, 4
      %v379 = vadd.f32 %v377, %v378
      %v380 = vrot.slane %v379, 2
      %v381 = vadd.f32 %v379, %v380
      %v382 = vrot.slane %v381, 1
      %v383 = vadd.f32 %v381, %v382
      %v384 = vrot.slane %v373, 4
      %v385 = vadd.f32 %v373, %v384
      %v386 = vrot.slane %v385, 2
      %v387 = vadd.f32 %v385, %v386
      %v388 = vrot.slane %v387, 1
      %v389 = vadd.f32 %v387, %v388
      %v390 = vrot.slane %v376, 4
      %v391 = vadd.f32 %v376, %v390
      %v392 = vrot.slane %v391, 2
      %v393 = vadd.f32 %v391, %v392
      %v394 = vrot.slane %v393, 1
      %v395 = vadd.f32 %v393, %v394
      %v396 = vld [vmem:[%s259] sm:$0xf]
      %vm397 = vcmask 1040384
      %v398 = vsel %vm397, %v314, %v337
      %vm399 = vcmask 1041408
      %v400 = vsel %vm399, %v398, %v360
      %vm401 = vcmask 1042432
      %v402 = vsel %vm401, %v400, %v383
      %v403 = vadd.f32 %v396, %v402
      %404 = vst [vmem:[%s259] sm:$0xf] %v403
      %v405 = vld [vmem:[%s263] sm:$0xf]
      %v406 = vsel %vm397, %v320, %v343
      %v407 = vsel %vm399, %v406, %v366
      %v408 = vsel %vm401, %v407, %v389
      %v409 = vadd.f32 %v405, %v408
      %410 = vst [vmem:[%s263] sm:$0xf] %v409
      %v411 = vld [vmem:[%s267] sm:$0xf]
      %v412 = vsel %vm397, %v326, %v349
      %v413 = vsel %vm399, %v412, %v372
      %v414 = vsel %vm401, %v413, %v395
      %v415 = vadd.f32 %v411, %v414
      %416 = vst [vmem:[%s267] sm:$0xf] %v415
      %p417 = scmp.lt.s32.totalorder %s20, 1
      %s418 = scalar_select %p417, %s20, 1
      %s419 = smul.addr %s418, 4
      %s420 = scalar_lea.vmem %s2, %s419
      %p421 = scmp.lt.s32.totalorder %s20, 1
      %s422 = scalar_select %p421, %s20, 1
      %s423 = smul.addr %s422, 4
      %s424 = scalar_lea.vmem %s3, %s423
      %p425 = scmp.lt.s32.totalorder %s20, 1
      %s426 = scalar_select %p425, %s20, 1
      %s427 = smul.addr %s426, 4
      %s428 = scalar_lea.vmem %s4, %s427
      // Predicated region
      $region33: #{joint_edge_dice_loss.2} parent=27 // pred_check
        %p429 = pneg %p102
      $region34: #{joint_edge_dice_loss.2} parent=27 // pred_check_branch
        %431 = sbr.rel (%p429) target = $region36
      $region35: #{joint_edge_dice_loss.2} parent=27 // pred_region
        _
      $region36: #{joint_edge_dice_loss.2} parent=27 // pred_fallthru
        _
      // Predicated region
      $region37: #{joint_edge_dice_loss.2} parent=27 // pred_check
        %p432 = pneg %p128
      $region38: #{joint_edge_dice_loss.2} parent=27 // pred_check_branch
        %434 = sbr.rel (%p432) target = $region40
      $region39: #{joint_edge_dice_loss.2} parent=27 // pred_region
        _
      $region40: #{joint_edge_dice_loss.2} parent=27 // pred_fallthru
        _
      // Predicated region
      $region41: #{joint_edge_dice_loss.2} parent=27 // pred_check
        %p435 = pneg %p154
      $region42: #{joint_edge_dice_loss.2} parent=27 // pred_check_branch
        %437 = sbr.rel (%p435) target = $region44
      $region43: #{joint_edge_dice_loss.2} parent=27 // pred_region
        _
      $region44: #{joint_edge_dice_loss.2} parent=27 // pred_fallthru
        _
    $region28: #{joint_edge_dice_loss.2} parent=5 // pred_fallthru
      _
    %p438 = scmp.le.s32.totalorder 2, %s11
    // Predicated region
    $region45: #{joint_edge_dice_loss.2} parent=5 // pred_check
      %p439 = pneg %p438
    $region46: #{joint_edge_dice_loss.2} parent=5 // pred_check_branch
      %441 = sbr.rel (%p439) target = $region48
    $region47: #{joint_edge_dice_loss.2} parent=5 // pred_region
      %s442 = ssub.s32 %s11, 2
      // Predicated region
      $region49: #{joint_edge_dice_loss.2} parent=47 // pred_check
        %p443 = pneg %p108
      $region50: #{joint_edge_dice_loss.2} parent=47 // pred_check_branch
        %445 = sbr.rel (%p443) target = $region52
      $region51: #{joint_edge_dice_loss.2} parent=47 // pred_region
        %p446 = scmp.lt.s32.totalorder %s22, 1
        %s447 = scalar_select %p446, %s22, 1
        %s448 = smul.addr %s447, 4
        %s449 = scalar_lea.vmem %s2, %s448
      $region52: #{joint_edge_dice_loss.2} parent=47 // pred_fallthru
        _
      // Predicated region
      $region53: #{joint_edge_dice_loss.2} parent=47 // pred_check
        %p450 = pneg %p134
      $region54: #{joint_edge_dice_loss.2} parent=47 // pred_check_branch
        %452 = sbr.rel (%p450) target = $region56
      $region55: #{joint_edge_dice_loss.2} parent=47 // pred_region
        %p453 = scmp.lt.s32.totalorder %s22, 1
        %s454 = scalar_select %p453, %s22, 1
        %s455 = smul.addr %s454, 4
        %s456 = scalar_lea.vmem %s3, %s455
      $region56: #{joint_edge_dice_loss.2} parent=47 // pred_fallthru
        _
      // Predicated region
      $region57: #{joint_edge_dice_loss.2} parent=47 // pred_check
        %p457 = pneg %p160
      $region58: #{joint_edge_dice_loss.2} parent=47 // pred_check_branch
        %459 = sbr.rel (%p457) target = $region60
      $region59: #{joint_edge_dice_loss.2} parent=47 // pred_region
        %p460 = scmp.lt.s32.totalorder %s22, 1
        %s461 = scalar_select %p460, %s22, 1
        %s462 = smul.addr %s461, 4
        %s463 = scalar_lea.vmem %s4, %s462
      $region60: #{joint_edge_dice_loss.2} parent=47 // pred_fallthru
        _
    $region48: #{joint_edge_dice_loss.2} parent=5 // pred_fallthru
      _
  $region6: #{joint_edge_dice_loss.2} parent=0 // loop_footer
    %s15 = sadd.s32 1, %s11
  $region7: #{joint_edge_dice_loss.2} parent=0 // loop_footer_branch
    %10 = sbr.rel target = $region3
  $region8: #{joint_edge_dice_loss.2} parent=0 // loop_exit
    _

</llo_original>
